<compile_context>
chip_gen: v5e
topology: v5e:2x2
jax: 0.10.0
libtpu: 0.0.40
codegen_flags: <defaults>
</compile_context>

<pallas_src>
import math
from functools import partial

import jax
import jax.numpy as jnp
from jax.experimental import pallas as pl
from jax.experimental.pallas import tpu as pltpu

MATMUL_DTYPE = jnp.bfloat16   # MXU operand dtype; accumulation stays float32


# ----------------------------- in-kernel helpers -----------------------------

def _layernorm(x, w, b, eps=1e-5):
    mu = jnp.mean(x, axis=-1, keepdims=True)
    xc = x - mu
    var = jnp.mean(xc * xc, axis=-1, keepdims=True)
    return xc * jax.lax.rsqrt(var + eps) * w + b


def _gelu_exact(x):
    # nn.GELU() default (approximate='none') -> exact erf formulation.
    # TODO(synk): tanh-approx GELU would route through the EUP (helps v5e VALU)
    # but deviates from the exact-erf reference.
    return 0.5 * x * (1.0 + jax.lax.erf(x * (1.0 / math.sqrt(2.0))))


# ----------------------------- Pallas kernels --------------------------------

def gpt_blocks_kernel(n_head, n_layer,
                      x_ref,
                      ln1w, ln1b, wqkv, bqkv, wpr, bpr,
                      ln2w, ln2b, wfc, bfc, wp2, bp2,
                      lnfw, lnfb,
                      out_ref,
                      x_carry):
    """Grid = (B//Bblk, L). One invocation = one transformer Block applied to a
    whole batch block, so per-layer weights stream from HBM once per layer.

    Residual stream (Bblk, T, C) is carried across the layer axis in VMEM.
    On the last layer, ln_f is applied to the last token only and written out.
    """
    l = pl.program_id(1)

    @pl.when(l == 0)
    def _():
        x_carry[...] = x_ref[...]          # load embeddings once per batch block

    x3 = x_carry[...]                       # (Bb, T, C) float32 residual stream
    Bb, T, C = x3.shape
    BT = Bb * T
    hd = C // n_head
    scale = 1.0 / math.sqrt(hd)
    cdt = wqkv.dtype                        # MXU operand dtype (bf16)

    x = x3.reshape(BT, C)                   # batch folded into the matmul M dim

    # ------------------------- attention branch -------------------------
    h = _layernorm(x, ln1w[0], ln1b[0])
    qkv = jnp.dot(h.astype(cdt), wqkv[0],
                  preferred_element_type=jnp.float32) + bqkv[0]       # (BT, 3C)
    q = qkv[:, 0 * C:1 * C].reshape(Bb, T, C)
    k = qkv[:, 1 * C:2 * C].reshape(Bb, T, C)
    v = qkv[:, 2 * C:3 * C].reshape(Bb, T, C)

    row = jax.lax.broadcasted_iota(jnp.int32, (T, T), 0)
    col = jax.lax.broadcasted_iota(jnp.int32, (T, T), 1)
    causal = row >= col

    wpr_t = wpr[0]                          # (C, C) bf16, load once

    # Static loop over heads (small n_head); output projection fused into the
    # loop so per-head results accumulate lane-dense into a (BT, C) f32 value.
    # TODO(synk): lax.fori_loop + (tq, tk) flash tiling for large n_head / long T.
    y_acc = jnp.zeros((BT, C), jnp.float32)
    for i in range(n_head):
        sl = slice(i * hd, (i + 1) * hd)
        qh = q[:, :, sl].astype(cdt)
        kh = k[:, :, sl].astype(cdt)
        vh = v[:, :, sl].astype(cdt)
        # contract over head_dim -> no explicit kh transpose materialized
        att = jnp.einsum('btd,bsd->bts', qh, kh,
                         preferred_element_type=jnp.float32) * scale   # (Bb,T,T)
        att = jnp.where(causal, att, -1e30)
        att = att - jnp.max(att, axis=-1, keepdims=True)
        p = jnp.exp(att)
        inv = pl.reciprocal(jnp.sum(p, axis=-1, keepdims=True), approx=True)  # EUP
        p = (p * inv).astype(cdt)
        yh = jnp.einsum('bts,bsd->btd', p, vh,
                        preferred_element_type=jnp.float32)            # (Bb,T,hd)
        # fused output projection: rows [i*hd, (i+1)*hd) of W_proj
        y_acc = y_acc + jnp.dot(yh.reshape(BT, hd).astype(cdt), wpr_t[sl, :],
                                preferred_element_type=jnp.float32)
    x = x + y_acc + bpr[0]

    # ----------------------------- MLP branch ---------------------------
    h2 = _layernorm(x, ln2w[0], ln2b[0])
    a = jnp.dot(h2.astype(cdt), wfc[0], preferred_element_type=jnp.float32) + bfc[0]
    g = _gelu_exact(a)
    m = jnp.dot(g.astype(cdt), wp2[0], preferred_element_type=jnp.float32) + bp2[0]
    x = x + m

    x_carry[...] = x.reshape(Bb, T, C)

    # Final layer: ln_f on the last token only (targets=None path needs only it).
    @pl.when(l == n_layer - 1)
    def _():
        x_last = x.reshape(Bb, T, C)[:, T - 1:T, :]                    # (Bb,1,C)
        out_ref[...] = _layernorm(x_last, lnfw[...], lnfb[...])


def lm_head_kernel(x_ref, w_ref, b_ref, out_ref):
    """Grid = (V//tv,). One (B, C) @ (C, tv) matmul per vocab tile."""
    xt = x_ref[...][:, 0, :]                                           # (B, C) f32
    y = jnp.dot(xt.astype(w_ref.dtype), w_ref[...],
                preferred_element_type=jnp.float32) + b_ref[...]       # (B, tv)
    out_ref[...] = y[:, None, :]                                       # (B, 1, tv)


# ----------------------------- wrappers ---------------------------------------

def _blocks_vmem_limit_bytes(Bblk, T, C, wbytes=2):
    """Estimated resident VMEM: double-buffered layer weights/biases + input and
    output blocks, plus the single-buffered residual carry. Clamped so it is safe
    on every chip at the tested sizes; v7x at real scale needs MLP-weight chunking
    (see TODO at top) before raising beyond its 64 MiB physical VMEM."""
    layer_w = (C * 3 * C + C * C + C * 4 * C + 4 * C * C) * wbytes
    layer_b = (3 * C + C + 4 * C + C + 4 * C) * 4
    xin = Bblk * T * C * 4
    out = Bblk * C * 4
    lnf = 2 * C * 4
    est = 2 * (layer_w + layer_b + xin + out + lnf) + Bblk * T * C * 4
    return int(min(max(2 * est, 32 << 20), 100 << 20))


def run_gpt_blocks(x, p, n_head):
    """Fused all-layer transformer stack. Returns ln_f(last token): (B, 1, C)."""
    B, T, C = x.shape
    L = p["ln1w"].shape[0]

    stacked = [p["ln1w"], p["ln1b"], p["wqkv"], p["bqkv"], p["wpr"], p["bpr"],
               p["ln2w"], p["ln2b"], p["wfc"], p["bfc"], p["wp2"], p["bp2"]]

    def layer_spec(a):
        # (L, d0, d1) stacked weights: stream one layer per grid step, indexed by l.
        return pl.BlockSpec((1,) + a.shape[1:], lambda nb, l: (l, 0, 0))

    # ln_f params are constant over the whole grid.
    const_spec = pl.BlockSpec((1, C), lambda nb, l: (0, 0))

    # TODO(synk): for B*T*C too large for VMEM, block the batch (Bblk < B) here.
    Bblk = B
    in_specs = [pl.BlockSpec((Bblk, T, C), lambda nb, l: (nb, 0, 0))]
    in_specs += [layer_spec(a) for a in stacked]
    in_specs += [const_spec, const_spec]

    return pl.pallas_call(
        partial(gpt_blocks_kernel, n_head, L),
        out_shape=jax.ShapeDtypeStruct((B, 1, C), jnp.float32),
        grid=(B // Bblk, L),
        in_specs=in_specs,
        out_specs=pl.BlockSpec((Bblk, 1, C), lambda nb, l: (nb, 0, 0)),
        scratch_shapes=[pltpu.VMEM((Bblk, T, C), jnp.float32)],   # residual carry
        compiler_params=pltpu.CompilerParams(
            dimension_semantics=("parallel", "arbitrary"),
            vmem_limit_bytes=_blocks_vmem_limit_bytes(Bblk, T, C)),
    )(x, *stacked, p["ln_f_w"], p["ln_f_b"])


def _vocab_tile(V, cap=4096):
    """Largest multiple of 128 that divides V (capped); fall back to full V."""
    if V % 128 != 0:
        return V
    t = min(cap, V)
    t -= t % 128
    while V % t != 0:
        t -= 128
    return t


def run_lm_head(x_last_norm, we_t, lm_b):
    """Vocab-tiled lm_head on the normalized last token; batch folded per tile."""
    B = x_last_norm.shape[0]
    C, V = we_t.shape
    tv = _vocab_tile(V)
    return pl.pallas_call(
        lm_head_kernel,
        out_shape=jax.ShapeDtypeStruct((B, 1, V), jnp.float32),
        grid=(V // tv,),
        in_specs=[pl.BlockSpec((B, 1, C), lambda v: (0, 0, 0)),
                  pl.BlockSpec((C, tv), lambda v: (0, v)),
                  pl.BlockSpec((1, tv), lambda v: (0, v))],
        out_specs=pl.BlockSpec((B, 1, tv), lambda v: (0, 0, v)),
        compiler_params=pltpu.CompilerParams(
            dimension_semantics=("parallel",)),
    )(x_last_norm, we_t, lm_b)


def gpt_forward(idx, params, cfg):
    """Mirrors GPT.forward(idx, targets=None): returns (logits, None)."""
    B, T = idx.shape
    assert T < cfg["block_size"], "Cannot forward sequence longer than block_size - 1"

    E, wpe = params["wte"], params["wpe"]
    tok_embd = jnp.take(E, idx, axis=0)        # (B, T, C) embedding gather (glue)
    pos_embd = wpe[:T][None, :, :]             # (1, T, C)
    x = tok_embd + pos_embd                    # drop(p=0) -> identity

    x_last = run_gpt_blocks(x, params, cfg["n_head"])             # (B, 1, C) ln_f'ed
    logits = run_lm_head(x_last, params["we_t"], params["lm_b"])  # (B, 1, V)
    return logits, None


# ----------------------------- parameter init ---------------------------------

def init_params(key, cfg, matmul_dtype=MATMUL_DTYPE):
    V, C, L, BS = cfg["vocab_size"], cfg["n_embd"], cfg["n_layer"], cfg["block_size"]
    std = 0.02
    proj_std = 0.02 / math.sqrt(2 * L)

    keys = jax.random.split(key, 2 + 4 * L)
    E = std * jax.random.normal(keys[0], (V, C), jnp.float32)   # tied wte / lm_head
    wpe = std * jax.random.normal(keys[1], (BS, C), jnp.float32)

    wqkv_l, wpr_l, wfc_l, wp2_l = [], [], [], []
    for l in range(L):
        k0, k1, k2, k3 = keys[2 + 4 * l: 6 + 4 * l]
        wqkv_l.append((std * jax.random.normal(k0, (3 * C, C), jnp.float32)).T)       # (C, 3C)
        wpr_l.append((proj_std * jax.random.normal(k1, (C, C), jnp.float32)).T)       # (C, C)
        wfc_l.append((std * jax.random.normal(k2, (4 * C, C), jnp.float32)).T)        # (C, 4C)
        wp2_l.append((proj_std * jax.random.normal(k3, (C, 4 * C), jnp.float32)).T)   # (4C, C)

    return {
        "wte": E,                                         # f32 for the embedding gather
        "we_t": E.T.astype(matmul_dtype),                 # (C, V) for tied lm_head
        "lm_b": jnp.zeros((1, V), jnp.float32),           # lm_head bias (zero-init)
        "wpe": wpe,
        # per-layer weights stacked on a leading L axis, streamed layer-by-layer
        "ln1w": jnp.ones((L, 1, C), jnp.float32),
        "ln1b": jnp.zeros((L, 1, C), jnp.float32),
        "wqkv": jnp.stack(wqkv_l).astype(matmul_dtype),   # (L, C, 3C)
        "bqkv": jnp.zeros((L, 1, 3 * C), jnp.float32),
        "wpr": jnp.stack(wpr_l).astype(matmul_dtype),     # (L, C, C)
        "bpr": jnp.zeros((L, 1, C), jnp.float32),
        "ln2w": jnp.ones((L, 1, C), jnp.float32),
        "ln2b": jnp.zeros((L, 1, C), jnp.float32),
        "wfc": jnp.stack(wfc_l).astype(matmul_dtype),     # (L, C, 4C)
        "bfc": jnp.zeros((L, 1, 4 * C), jnp.float32),
        "wp2": jnp.stack(wp2_l).astype(matmul_dtype),     # (L, 4C, C)
        "bp2": jnp.zeros((L, 1, C), jnp.float32),
        "ln_f_w": jnp.ones((1, C), jnp.float32),
        "ln_f_b": jnp.zeros((1, C), jnp.float32),
    }


# ----------------------------- main --------------------------------------------

if __name__ == "__main__":
    cfg = dict(vocab_size=128, block_size=16, n_embd=32, n_head=4,
               n_layer=2, dropout=0.0, bias=True)

    key = jax.random.PRNGKey(0)
    pkey, ikey = jax.random.split(key)
    params = init_params(pkey, cfg)

    B, T = 2, 8
    idx = jax.random.randint(ikey, (B, T), 0, cfg["vocab_size"], dtype=jnp.int32)

    logits, loss = gpt_forward(idx, params, cfg)
    logits = jax.block_until_ready(logits)
    assert logits.shape == (B, 1, cfg["vocab_size"])
    assert loss is None
    # TODO(synk): generate()/cross-entropy-loss paths (torch.multinomial,
    # F.cross_entropy) are outside the targets=None forward pass and not implemented.
    print("KERNEL_OK")
</pallas_src>

<mosaic_0001>
module attributes {stable_mosaic.version = 11 : i64} {
  func.func @gpt_blocks_kernel(%arg0: i32, %arg1: i32, %arg2: memref<2x8x32xf32, #tpu.memory_space<vmem>>, %arg3: memref<1x1x32xf32, #tpu.memory_space<vmem>>, %arg4: memref<1x1x32xf32, #tpu.memory_space<vmem>>, %arg5: memref<1x32x96xbf16, #tpu.memory_space<vmem>>, %arg6: memref<1x1x96xf32, #tpu.memory_space<vmem>>, %arg7: memref<1x32x32xbf16, #tpu.memory_space<vmem>>, %arg8: memref<1x1x32xf32, #tpu.memory_space<vmem>>, %arg9: memref<1x1x32xf32, #tpu.memory_space<vmem>>, %arg10: memref<1x1x32xf32, #tpu.memory_space<vmem>>, %arg11: memref<1x32x128xbf16, #tpu.memory_space<vmem>>, %arg12: memref<1x1x128xf32, #tpu.memory_space<vmem>>, %arg13: memref<1x128x32xbf16, #tpu.memory_space<vmem>>, %arg14: memref<1x1x32xf32, #tpu.memory_space<vmem>>, %arg15: memref<1x32xf32, #tpu.memory_space<vmem>>, %arg16: memref<1x32xf32, #tpu.memory_space<vmem>>, %arg17: memref<2x1x32xf32, #tpu.memory_space<vmem>>, %arg18: memref<2x8x32xf32, #tpu.memory_space<vmem>>) attributes {dimension_semantics = [#tpu.dimension_semantics<parallel>, #tpu.dimension_semantics<arbitrary>], iteration_bounds = array<i64: 1, 2>, scalar_prefetch = 0 : i64, scratch_operands = 1 : i64, tpu.core_type = #tpu.core_type<tc>, window_params = [{transform_indices = @transform_0, window_bounds = array<i64: 2, 8, 32>}, {transform_indices = @transform_1, window_bounds = array<i64: 1, 1, 32>}, {transform_indices = @transform_2, window_bounds = array<i64: 1, 1, 32>}, {transform_indices = @transform_3, window_bounds = array<i64: 1, 32, 96>}, {transform_indices = @transform_4, window_bounds = array<i64: 1, 1, 96>}, {transform_indices = @transform_5, window_bounds = array<i64: 1, 32, 32>}, {transform_indices = @transform_6, window_bounds = array<i64: 1, 1, 32>}, {transform_indices = @transform_7, window_bounds = array<i64: 1, 1, 32>}, {transform_indices = @transform_8, window_bounds = array<i64: 1, 1, 32>}, {transform_indices = @transform_9, window_bounds = array<i64: 1, 32, 128>}, {transform_indices = @transform_10, window_bounds = array<i64: 1, 1, 128>}, {transform_indices = @transform_11, window_bounds = array<i64: 1, 128, 32>}, {transform_indices = @transform_12, window_bounds = array<i64: 1, 1, 32>}, {pipeline_mode = #tpu.pipeline_mode<synchronous>, transform_indices = @transform_13, window_bounds = array<i64: 1, 32>}, {pipeline_mode = #tpu.pipeline_mode<synchronous>, transform_indices = @transform_14, window_bounds = array<i64: 1, 32>}, {transform_indices = @transform_15, window_bounds = array<i64: 2, 1, 32>}]} {
    %c0_i32 = arith.constant 0 : i32
    %0 = arith.cmpi eq, %arg1, %c0_i32 : i32
    %1 = arith.extui %0 : i1 to i32
    %c0_i32_0 = arith.constant 0 : i32
    %2 = arith.cmpi ne, %1, %c0_i32_0 : i32
    scf.if %2 {
      %c0_87 = arith.constant 0 : index
      %c0_88 = arith.constant 0 : index
      %c0_89 = arith.constant 0 : index
      %228 = vector.load %arg2[%c0_87, %c0_88, %c0_89] : memref<2x8x32xf32, #tpu.memory_space<vmem>>, vector<2x8x32xf32>
      %c0_90 = arith.constant 0 : index
      %c0_91 = arith.constant 0 : index
      %c0_92 = arith.constant 0 : index
      %229 = vector.load %arg18[%c0_90, %c0_91, %c0_92] : memref<2x8x32xf32, #tpu.memory_space<vmem>>, vector<2x8x32xf32>
      tpu.vector_store %arg18[%c0_90, %c0_91, %c0_92], %228 {strides = array<i32>} : memref<2x8x32xf32, #tpu.memory_space<vmem>>, vector<2x8x32xf32>,
    } else {
    }
    %c0 = arith.constant 0 : index
    %c0_1 = arith.constant 0 : index
    %c0_2 = arith.constant 0 : index
    %3 = vector.load %arg18[%c0, %c0_1, %c0_2] : memref<2x8x32xf32, #tpu.memory_space<vmem>>, vector<2x8x32xf32>
    %4 = vector.shape_cast %3 : vector<2x8x32xf32> to vector<16x32xf32>
    %c0_3 = arith.constant 0 : index
    %c0_4 = arith.constant 0 : index
    %c0_5 = arith.constant 0 : index
    %5 = vector.load %arg3[%c0_3, %c0_4, %c0_5] : memref<1x1x32xf32, #tpu.memory_space<vmem>>, vector<1x1x32xf32>
    %6 = vector.shape_cast %5 : vector<1x1x32xf32> to vector<1x32xf32>
    %c0_6 = arith.constant 0 : index
    %c0_7 = arith.constant 0 : index
    %c0_8 = arith.constant 0 : index
    %7 = vector.load %arg4[%c0_6, %c0_7, %c0_8] : memref<1x1x32xf32, #tpu.memory_space<vmem>>, vector<1x1x32xf32>
    %8 = vector.shape_cast %7 : vector<1x1x32xf32> to vector<1x32xf32>
    %cst = arith.constant dense<0.000000e+00> : vector<16xf32>
    %9 = vector.multi_reduction <add>, %4, %cst [1] : vector<16x32xf32> to vector<16xf32>
    %10 = vector.shape_cast %9 : vector<16xf32> to vector<16x1xf32>
    %cst_9 = arith.constant 3.200000e+01 : f32
    %11 = vector.broadcast %cst_9 : f32 to vector<16x1xf32>
    %12 = arith.divf %10, %11 : vector<16x1xf32>
    %13 = vector.broadcast %12 : vector<16x1xf32> to vector<16x32xf32>
    %14 = arith.subf %4, %13 : vector<16x32xf32>
    %15 = arith.mulf %14, %14 : vector<16x32xf32>
    %cst_10 = arith.constant dense<0.000000e+00> : vector<16xf32>
    %16 = vector.multi_reduction <add>, %15, %cst_10 [1] : vector<16x32xf32> to vector<16xf32>
    %17 = vector.shape_cast %16 : vector<16xf32> to vector<16x1xf32>
    %cst_11 = arith.constant 3.200000e+01 : f32
    %18 = vector.broadcast %cst_11 : f32 to vector<16x1xf32>
    %19 = arith.divf %17, %18 : vector<16x1xf32>
    %cst_12 = arith.constant 9.99999974E-6 : f32
    %20 = vector.broadcast %cst_12 : f32 to vector<16x1xf32>
    %21 = arith.addf %19, %20 : vector<16x1xf32>
    %22 = math.rsqrt %21 : vector<16x1xf32>
    %23 = vector.broadcast %22 : vector<16x1xf32> to vector<16x32xf32>
    %24 = arith.mulf %14, %23 : vector<16x32xf32>
    %25 = vector.broadcast %6 : vector<1x32xf32> to vector<16x32xf32>
    %26 = arith.mulf %24, %25 : vector<16x32xf32>
    %27 = vector.broadcast %8 : vector<1x32xf32> to vector<16x32xf32>
    %28 = arith.addf %26, %27 : vector<16x32xf32>
    %29 = arith.truncf %28 : vector<16x32xf32> to vector<16x32xbf16>
    %c0_13 = arith.constant 0 : index
    %c0_14 = arith.constant 0 : index
    %c0_15 = arith.constant 0 : index
    %30 = vector.load %arg5[%c0_13, %c0_14, %c0_15] : memref<1x32x96xbf16, #tpu.memory_space<vmem>>, vector<1x32x96xbf16>
    %31 = vector.shape_cast %30 : vector<1x32x96xbf16> to vector<32x96xbf16>
    %cst_16 = arith.constant dense<0.000000e+00> : vector<16x96xf32>
    %32 = tpu.matmul %29, %31, %cst_16 {dimension_numbers = #tpu.dot_dimension_numbers<[1], [0], [0], [1], [0, 0, 1, 1], [], []>} : vector<16x32xbf16>, vector<32x96xbf16>, vector<16x96xf32> -> vector<16x96xf32>
    %c0_17 = arith.constant 0 : index
    %c0_18 = arith.constant 0 : index
    %c0_19 = arith.constant 0 : index
    %33 = vector.load %arg6[%c0_17, %c0_18, %c0_19] : memref<1x1x96xf32, #tpu.memory_space<vmem>>, vector<1x1x96xf32>
    %34 = vector.shape_cast %33 : vector<1x1x96xf32> to vector<1x96xf32>
    %35 = vector.broadcast %34 : vector<1x96xf32> to vector<16x96xf32>
    %36 = arith.addf %32, %35 : vector<16x96xf32>
    %37 = vector.extract_strided_slice %36 {offsets = [0, 0], sizes = [16, 32], strides = [1, 1]} : vector<16x96xf32> to vector<16x32xf32>
    %38 = vector.shape_cast %37 : vector<16x32xf32> to vector<2x8x32xf32>
    %39 = vector.extract_strided_slice %36 {offsets = [0, 32], sizes = [16, 32], strides = [1, 1]} : vector<16x96xf32> to vector<16x32xf32>
    %40 = vector.shape_cast %39 : vector<16x32xf32> to vector<2x8x32xf32>
    %41 = vector.extract_strided_slice %36 {offsets = [0, 64], sizes = [16, 32], strides = [1, 1]} : vector<16x96xf32> to vector<16x32xf32>
    %42 = vector.shape_cast %41 : vector<16x32xf32> to vector<2x8x32xf32>
    %43 = tpu.iota {dimensions = array<i32: 0>} : vector<8x8xi32>
    %44 = tpu.iota {dimensions = array<i32: 1>} : vector<8x8xi32>
    %45 = arith.cmpi sge, %43, %44 : vector<8x8xi32>
    %c0_20 = arith.constant 0 : index
    %c0_21 = arith.constant 0 : index
    %c0_22 = arith.constant 0 : index
    %46 = vector.load %arg7[%c0_20, %c0_21, %c0_22] : memref<1x32x32xbf16, #tpu.memory_space<vmem>>, vector<1x32x32xbf16>
    %47 = vector.shape_cast %46 : vector<1x32x32xbf16> to vector<32x32xbf16>
    %cst_23 = arith.constant 0.000000e+00 : f32
    %48 = vector.broadcast %cst_23 : f32 to vector<16x32xf32>
    %49 = vector.extract_strided_slice %38 {offsets = [0, 0, 0], sizes = [2, 8, 8], strides = [1, 1, 1]} : vector<2x8x32xf32> to vector<2x8x8xf32>
    %50 = arith.truncf %49 : vector<2x8x8xf32> to vector<2x8x8xbf16>
    %51 = vector.extract_strided_slice %40 {offsets = [0, 0, 0], sizes = [2, 8, 8], strides = [1, 1, 1]} : vector<2x8x32xf32> to vector<2x8x8xf32>
    %52 = arith.truncf %51 : vector<2x8x8xf32> to vector<2x8x8xbf16>
    %53 = vector.extract_strided_slice %42 {offsets = [0, 0, 0], sizes = [2, 8, 8], strides = [1, 1, 1]} : vector<2x8x32xf32> to vector<2x8x8xf32>
    %54 = arith.truncf %53 : vector<2x8x8xf32> to vector<2x8x8xbf16>
    "tpu.trace_start"() <{level = 10 : i32, message = "btd,bsd->bts"}> : () -> ()
    %cst_24 = arith.constant dense<0.000000e+00> : vector<2x8x8xf32>
    %55 = tpu.matmul %50, %52, %cst_24 {dimension_numbers = #tpu.dot_dimension_numbers<[2], [2], [1], [1], [0, 0, 0, 1, 1, 1], [0], [0]>} : vector<2x8x8xbf16>, vector<2x8x8xbf16>, vector<2x8x8xf32> -> vector<2x8x8xf32>
    "tpu.trace_stop"() : () -> ()
    %cst_25 = arith.constant 0.353553385 : f32
    %56 = vector.broadcast %cst_25 : f32 to vector<2x8x8xf32>
    %57 = arith.mulf %55, %56 : vector<2x8x8xf32>
    %cst_26 = arith.constant -1.000000e+30 : f32
    %58 = vector.shape_cast %45 : vector<8x8xi1> to vector<1x8x8xi1>
    %59 = vector.broadcast %58 : vector<1x8x8xi1> to vector<2x8x8xi1>
    %60 = vector.broadcast %cst_26 : f32 to vector<2x8x8xf32>
    %61 = arith.select %59, %57, %60 : vector<2x8x8xi1>, vector<2x8x8xf32>
    %cst_27 = arith.constant dense<0xFF800000> : vector<2x8xf32>
    %62 = vector.multi_reduction <maximumf>, %61, %cst_27 [2] : vector<2x8x8xf32> to vector<2x8xf32>
    %63 = vector.shape_cast %62 : vector<2x8xf32> to vector<2x8x1xf32>
    %64 = vector.broadcast %63 : vector<2x8x1xf32> to vector<2x8x8xf32>
    %65 = arith.subf %61, %64 : vector<2x8x8xf32>
    %66 = math.exp %65 : vector<2x8x8xf32>
    %cst_28 = arith.constant dense<0.000000e+00> : vector<2x8xf32>
    %67 = vector.multi_reduction <add>, %66, %cst_28 [2] : vector<2x8x8xf32> to vector<2x8xf32>
    %68 = vector.shape_cast %67 : vector<2x8xf32> to vector<2x8x1xf32>
    %69 = tpu.reciprocal %68 {approx = true} : vector<2x8x1xf32> -> vector<2x8x1xf32>
    %70 = vector.broadcast %69 : vector<2x8x1xf32> to vector<2x8x8xf32>
    %71 = arith.mulf %66, %70 : vector<2x8x8xf32>
    %72 = arith.truncf %71 : vector<2x8x8xf32> to vector<2x8x8xbf16>
    "tpu.trace_start"() <{level = 10 : i32, message = "bts,bsd->btd"}> : () -> ()
    %cst_29 = arith.constant dense<0.000000e+00> : vector<2x8x8xf32>
    %73 = tpu.matmul %72, %54, %cst_29 {dimension_numbers = #tpu.dot_dimension_numbers<[2], [1], [1], [2], [0, 0, 0, 1, 1, 2], [0], [0]>} : vector<2x8x8xbf16>, vector<2x8x8xbf16>, vector<2x8x8xf32> -> vector<2x8x8xf32>
    "tpu.trace_stop"() : () -> ()
    %74 = vector.shape_cast %73 : vector<2x8x8xf32> to vector<16x8xf32>
    %75 = arith.truncf %74 : vector<16x8xf32> to vector<16x8xbf16>
    %76 = vector.extract_strided_slice %47 {offsets = [0, 0], sizes = [8, 32], strides = [1, 1]} : vector<32x32xbf16> to vector<8x32xbf16>
    %cst_30 = arith.constant dense<0.000000e+00> : vector<16x32xf32>
    %77 = tpu.matmul %75, %76, %cst_30 {dimension_numbers = #tpu.dot_dimension_numbers<[1], [0], [0], [1], [0, 0, 1, 1], [], []>} : vector<16x8xbf16>, vector<8x32xbf16>, vector<16x32xf32> -> vector<16x32xf32>
    %78 = arith.addf %48, %77 : vector<16x32xf32>
    %79 = vector.extract_strided_slice %38 {offsets = [0, 0, 8], sizes = [2, 8, 8], strides = [1, 1, 1]} : vector<2x8x32xf32> to vector<2x8x8xf32>
    %80 = arith.truncf %79 : vector<2x8x8xf32> to vector<2x8x8xbf16>
    %81 = vector.extract_strided_slice %40 {offsets = [0, 0, 8], sizes = [2, 8, 8], strides = [1, 1, 1]} : vector<2x8x32xf32> to vector<2x8x8xf32>
    %82 = arith.truncf %81 : vector<2x8x8xf32> to vector<2x8x8xbf16>
    %83 = vector.extract_strided_slice %42 {offsets = [0, 0, 8], sizes = [2, 8, 8], strides = [1, 1, 1]} : vector<2x8x32xf32> to vector<2x8x8xf32>
    %84 = arith.truncf %83 : vector<2x8x8xf32> to vector<2x8x8xbf16>
    "tpu.trace_start"() <{level = 10 : i32, message = "btd,bsd->bts"}> : () -> ()
    %cst_31 = arith.constant dense<0.000000e+00> : vector<2x8x8xf32>
    %85 = tpu.matmul %80, %82, %cst_31 {dimension_numbers = #tpu.dot_dimension_numbers<[2], [2], [1], [1], [0, 0, 0, 1, 1, 1], [0], [0]>} : vector<2x8x8xbf16>, vector<2x8x8xbf16>, vector<2x8x8xf32> -> vector<2x8x8xf32>
    "tpu.trace_stop"() : () -> ()
    %cst_32 = arith.constant 0.353553385 : f32
    %86 = vector.broadcast %cst_32 : f32 to vector<2x8x8xf32>
    %87 = arith.mulf %85, %86 : vector<2x8x8xf32>
    %cst_33 = arith.constant -1.000000e+30 : f32
    %88 = vector.shape_cast %45 : vector<8x8xi1> to vector<1x8x8xi1>
    %89 = vector.broadcast %88 : vector<1x8x8xi1> to vector<2x8x8xi1>
    %90 = vector.broadcast %cst_33 : f32 to vector<2x8x8xf32>
    %91 = arith.select %89, %87, %90 : vector<2x8x8xi1>, vector<2x8x8xf32>
    %cst_34 = arith.constant dense<0xFF800000> : vector<2x8xf32>
    %92 = vector.multi_reduction <maximumf>, %91, %cst_34 [2] : vector<2x8x8xf32> to vector<2x8xf32>
    %93 = vector.shape_cast %92 : vector<2x8xf32> to vector<2x8x1xf32>
    %94 = vector.broadcast %93 : vector<2x8x1xf32> to vector<2x8x8xf32>
    %95 = arith.subf %91, %94 : vector<2x8x8xf32>
    %96 = math.exp %95 : vector<2x8x8xf32>
    %cst_35 = arith.constant dense<0.000000e+00> : vector<2x8xf32>
    %97 = vector.multi_reduction <add>, %96, %cst_35 [2] : vector<2x8x8xf32> to vector<2x8xf32>
    %98 = vector.shape_cast %97 : vector<2x8xf32> to vector<2x8x1xf32>
    %99 = tpu.reciprocal %98 {approx = true} : vector<2x8x1xf32> -> vector<2x8x1xf32>
    %100 = vector.broadcast %99 : vector<2x8x1xf32> to vector<2x8x8xf32>
    %101 = arith.mulf %96, %100 : vector<2x8x8xf32>
    %102 = arith.truncf %101 : vector<2x8x8xf32> to vector<2x8x8xbf16>
    "tpu.trace_start"() <{level = 10 : i32, message = "bts,bsd->btd"}> : () -> ()
    %cst_36 = arith.constant dense<0.000000e+00> : vector<2x8x8xf32>
    %103 = tpu.matmul %102, %84, %cst_36 {dimension_numbers = #tpu.dot_dimension_numbers<[2], [1], [1], [2], [0, 0, 0, 1, 1, 2], [0], [0]>} : vector<2x8x8xbf16>, vector<2x8x8xbf16>, vector<2x8x8xf32> -> vector<2x8x8xf32>
    "tpu.trace_stop"() : () -> ()
    %104 = vector.shape_cast %103 : vector<2x8x8xf32> to vector<16x8xf32>
    %105 = arith.truncf %104 : vector<16x8xf32> to vector<16x8xbf16>
    %106 = vector.extract_strided_slice %47 {offsets = [8, 0], sizes = [8, 32], strides = [1, 1]} : vector<32x32xbf16> to vector<8x32xbf16>
    %cst_37 = arith.constant dense<0.000000e+00> : vector<16x32xf32>
    %107 = tpu.matmul %105, %106, %cst_37 {dimension_numbers = #tpu.dot_dimension_numbers<[1], [0], [0], [1], [0, 0, 1, 1], [], []>} : vector<16x8xbf16>, vector<8x32xbf16>, vector<16x32xf32> -> vector<16x32xf32>
    %108 = arith.addf %78, %107 : vector<16x32xf32>
    %109 = vector.extract_strided_slice %38 {offsets = [0, 0, 16], sizes = [2, 8, 8], strides = [1, 1, 1]} : vector<2x8x32xf32> to vector<2x8x8xf32>
    %110 = arith.truncf %109 : vector<2x8x8xf32> to vector<2x8x8xbf16>
    %111 = vector.extract_strided_slice %40 {offsets = [0, 0, 16], sizes = [2, 8, 8], strides = [1, 1, 1]} : vector<2x8x32xf32> to vector<2x8x8xf32>
    %112 = arith.truncf %111 : vector<2x8x8xf32> to vector<2x8x8xbf16>
    %113 = vector.extract_strided_slice %42 {offsets = [0, 0, 16], sizes = [2, 8, 8], strides = [1, 1, 1]} : vector<2x8x32xf32> to vector<2x8x8xf32>
    %114 = arith.truncf %113 : vector<2x8x8xf32> to vector<2x8x8xbf16>
    "tpu.trace_start"() <{level = 10 : i32, message = "btd,bsd->bts"}> : () -> ()
    %cst_38 = arith.constant dense<0.000000e+00> : vector<2x8x8xf32>
    %115 = tpu.matmul %110, %112, %cst_38 {dimension_numbers = #tpu.dot_dimension_numbers<[2], [2], [1], [1], [0, 0, 0, 1, 1, 1], [0], [0]>} : vector<2x8x8xbf16>, vector<2x8x8xbf16>, vector<2x8x8xf32> -> vector<2x8x8xf32>
    "tpu.trace_stop"() : () -> ()
    %cst_39 = arith.constant 0.353553385 : f32
    %116 = vector.broadcast %cst_39 : f32 to vector<2x8x8xf32>
    %117 = arith.mulf %115, %116 : vector<2x8x8xf32>
    %cst_40 = arith.constant -1.000000e+30 : f32
    %118 = vector.shape_cast %45 : vector<8x8xi1> to vector<1x8x8xi1>
    %119 = vector.broadcast %118 : vector<1x8x8xi1> to vector<2x8x8xi1>
    %120 = vector.broadcast %cst_40 : f32 to vector<2x8x8xf32>
    %121 = arith.select %119, %117, %120 : vector<2x8x8xi1>, vector<2x8x8xf32>
    %cst_41 = arith.constant dense<0xFF800000> : vector<2x8xf32>
    %122 = vector.multi_reduction <maximumf>, %121, %cst_41 [2] : vector<2x8x8xf32> to vector<2x8xf32>
    %123 = vector.shape_cast %122 : vector<2x8xf32> to vector<2x8x1xf32>
    %124 = vector.broadcast %123 : vector<2x8x1xf32> to vector<2x8x8xf32>
    %125 = arith.subf %121, %124 : vector<2x8x8xf32>
    %126 = math.exp %125 : vector<2x8x8xf32>
    %cst_42 = arith.constant dense<0.000000e+00> : vector<2x8xf32>
    %127 = vector.multi_reduction <add>, %126, %cst_42 [2] : vector<2x8x8xf32> to vector<2x8xf32>
    %128 = vector.shape_cast %127 : vector<2x8xf32> to vector<2x8x1xf32>
    %129 = tpu.reciprocal %128 {approx = true} : vector<2x8x1xf32> -> vector<2x8x1xf32>
    %130 = vector.broadcast %129 : vector<2x8x1xf32> to vector<2x8x8xf32>
    %131 = arith.mulf %126, %130 : vector<2x8x8xf32>
    %132 = arith.truncf %131 : vector<2x8x8xf32> to vector<2x8x8xbf16>
    "tpu.trace_start"() <{level = 10 : i32, message = "bts,bsd->btd"}> : () -> ()
    %cst_43 = arith.constant dense<0.000000e+00> : vector<2x8x8xf32>
    %133 = tpu.matmul %132, %114, %cst_43 {dimension_numbers = #tpu.dot_dimension_numbers<[2], [1], [1], [2], [0, 0, 0, 1, 1, 2], [0], [0]>} : vector<2x8x8xbf16>, vector<2x8x8xbf16>, vector<2x8x8xf32> -> vector<2x8x8xf32>
    "tpu.trace_stop"() : () -> ()
    %134 = vector.shape_cast %133 : vector<2x8x8xf32> to vector<16x8xf32>
    %135 = arith.truncf %134 : vector<16x8xf32> to vector<16x8xbf16>
    %136 = vector.extract_strided_slice %47 {offsets = [16, 0], sizes = [8, 32], strides = [1, 1]} : vector<32x32xbf16> to vector<8x32xbf16>
    %cst_44 = arith.constant dense<0.000000e+00> : vector<16x32xf32>
    %137 = tpu.matmul %135, %136, %cst_44 {dimension_numbers = #tpu.dot_dimension_numbers<[1], [0], [0], [1], [0, 0, 1, 1], [], []>} : vector<16x8xbf16>, vector<8x32xbf16>, vector<16x32xf32> -> vector<16x32xf32>
    %138 = arith.addf %108, %137 : vector<16x32xf32>
    %139 = vector.extract_strided_slice %38 {offsets = [0, 0, 24], sizes = [2, 8, 8], strides = [1, 1, 1]} : vector<2x8x32xf32> to vector<2x8x8xf32>
    %140 = arith.truncf %139 : vector<2x8x8xf32> to vector<2x8x8xbf16>
    %141 = vector.extract_strided_slice %40 {offsets = [0, 0, 24], sizes = [2, 8, 8], strides = [1, 1, 1]} : vector<2x8x32xf32> to vector<2x8x8xf32>
    %142 = arith.truncf %141 : vector<2x8x8xf32> to vector<2x8x8xbf16>
    %143 = vector.extract_strided_slice %42 {offsets = [0, 0, 24], sizes = [2, 8, 8], strides = [1, 1, 1]} : vector<2x8x32xf32> to vector<2x8x8xf32>
    %144 = arith.truncf %143 : vector<2x8x8xf32> to vector<2x8x8xbf16>
    "tpu.trace_start"() <{level = 10 : i32, message = "btd,bsd->bts"}> : () -> ()
    %cst_45 = arith.constant dense<0.000000e+00> : vector<2x8x8xf32>
    %145 = tpu.matmul %140, %142, %cst_45 {dimension_numbers = #tpu.dot_dimension_numbers<[2], [2], [1], [1], [0, 0, 0, 1, 1, 1], [0], [0]>} : vector<2x8x8xbf16>, vector<2x8x8xbf16>, vector<2x8x8xf32> -> vector<2x8x8xf32>
    "tpu.trace_stop"() : () -> ()
    %cst_46 = arith.constant 0.353553385 : f32
    %146 = vector.broadcast %cst_46 : f32 to vector<2x8x8xf32>
    %147 = arith.mulf %145, %146 : vector<2x8x8xf32>
    %cst_47 = arith.constant -1.000000e+30 : f32
    %148 = vector.shape_cast %45 : vector<8x8xi1> to vector<1x8x8xi1>
    %149 = vector.broadcast %148 : vector<1x8x8xi1> to vector<2x8x8xi1>
    %150 = vector.broadcast %cst_47 : f32 to vector<2x8x8xf32>
    %151 = arith.select %149, %147, %150 : vector<2x8x8xi1>, vector<2x8x8xf32>
    %cst_48 = arith.constant dense<0xFF800000> : vector<2x8xf32>
    %152 = vector.multi_reduction <maximumf>, %151, %cst_48 [2] : vector<2x8x8xf32> to vector<2x8xf32>
    %153 = vector.shape_cast %152 : vector<2x8xf32> to vector<2x8x1xf32>
    %154 = vector.broadcast %153 : vector<2x8x1xf32> to vector<2x8x8xf32>
    %155 = arith.subf %151, %154 : vector<2x8x8xf32>
    %156 = math.exp %155 : vector<2x8x8xf32>
    %cst_49 = arith.constant dense<0.000000e+00> : vector<2x8xf32>
    %157 = vector.multi_reduction <add>, %156, %cst_49 [2] : vector<2x8x8xf32> to vector<2x8xf32>
    %158 = vector.shape_cast %157 : vector<2x8xf32> to vector<2x8x1xf32>
    %159 = tpu.reciprocal %158 {approx = true} : vector<2x8x1xf32> -> vector<2x8x1xf32>
    %160 = vector.broadcast %159 : vector<2x8x1xf32> to vector<2x8x8xf32>
    %161 = arith.mulf %156, %160 : vector<2x8x8xf32>
    %162 = arith.truncf %161 : vector<2x8x8xf32> to vector<2x8x8xbf16>
    "tpu.trace_start"() <{level = 10 : i32, message = "bts,bsd->btd"}> : () -> ()
    %cst_50 = arith.constant dense<0.000000e+00> : vector<2x8x8xf32>
    %163 = tpu.matmul %162, %144, %cst_50 {dimension_numbers = #tpu.dot_dimension_numbers<[2], [1], [1], [2], [0, 0, 0, 1, 1, 2], [0], [0]>} : vector<2x8x8xbf16>, vector<2x8x8xbf16>, vector<2x8x8xf32> -> vector<2x8x8xf32>
    "tpu.trace_stop"() : () -> ()
    %164 = vector.shape_cast %163 : vector<2x8x8xf32> to vector<16x8xf32>
    %165 = arith.truncf %164 : vector<16x8xf32> to vector<16x8xbf16>
    %166 = vector.extract_strided_slice %47 {offsets = [24, 0], sizes = [8, 32], strides = [1, 1]} : vector<32x32xbf16> to vector<8x32xbf16>
    %cst_51 = arith.constant dense<0.000000e+00> : vector<16x32xf32>
    %167 = tpu.matmul %165, %166, %cst_51 {dimension_numbers = #tpu.dot_dimension_numbers<[1], [0], [0], [1], [0, 0, 1, 1], [], []>} : vector<16x8xbf16>, vector<8x32xbf16>, vector<16x32xf32> -> vector<16x32xf32>
    %168 = arith.addf %138, %167 : vector<16x32xf32>
    %169 = arith.addf %4, %168 : vector<16x32xf32>
    %c0_52 = arith.constant 0 : index
    %c0_53 = arith.constant 0 : index
    %c0_54 = arith.constant 0 : index
    %170 = vector.load %arg8[%c0_52, %c0_53, %c0_54] : memref<1x1x32xf32, #tpu.memory_space<vmem>>, vector<1x1x32xf32>
    %171 = vector.shape_cast %170 : vector<1x1x32xf32> to vector<1x32xf32>
    %172 = vector.broadcast %171 : vector<1x32xf32> to vector<16x32xf32>
    %173 = arith.addf %169, %172 : vector<16x32xf32>
    %c0_55 = arith.constant 0 : index
    %c0_56 = arith.constant 0 : index
    %c0_57 = arith.constant 0 : index
    %174 = vector.load %arg9[%c0_55, %c0_56, %c0_57] : memref<1x1x32xf32, #tpu.memory_space<vmem>>, vector<1x1x32xf32>
    %175 = vector.shape_cast %174 : vector<1x1x32xf32> to vector<1x32xf32>
    %c0_58 = arith.constant 0 : index
    %c0_59 = arith.constant 0 : index
    %c0_60 = arith.constant 0 : index
    %176 = vector.load %arg10[%c0_58, %c0_59, %c0_60] : memref<1x1x32xf32, #tpu.memory_space<vmem>>, vector<1x1x32xf32>
    %177 = vector.shape_cast %176 : vector<1x1x32xf32> to vector<1x32xf32>
    %cst_61 = arith.constant dense<0.000000e+00> : vector<16xf32>
    %178 = vector.multi_reduction <add>, %173, %cst_61 [1] : vector<16x32xf32> to vector<16xf32>
    %179 = vector.shape_cast %178 : vector<16xf32> to vector<16x1xf32>
    %cst_62 = arith.constant 3.200000e+01 : f32
    %180 = vector.broadcast %cst_62 : f32 to vector<16x1xf32>
    %181 = arith.divf %179, %180 : vector<16x1xf32>
    %182 = vector.broadcast %181 : vector<16x1xf32> to vector<16x32xf32>
    %183 = arith.subf %173, %182 : vector<16x32xf32>
    %184 = arith.mulf %183, %183 : vector<16x32xf32>
    %cst_63 = arith.constant dense<0.000000e+00> : vector<16xf32>
    %185 = vector.multi_reduction <add>, %184, %cst_63 [1] : vector<16x32xf32> to vector<16xf32>
    %186 = vector.shape_cast %185 : vector<16xf32> to vector<16x1xf32>
    %cst_64 = arith.constant 3.200000e+01 : f32
    %187 = vector.broadcast %cst_64 : f32 to vector<16x1xf32>
    %188 = arith.divf %186, %187 : vector<16x1xf32>
    %cst_65 = arith.constant 9.99999974E-6 : f32
    %189 = vector.broadcast %cst_65 : f32 to vector<16x1xf32>
    %190 = arith.addf %188, %189 : vector<16x1xf32>
    %191 = math.rsqrt %190 : vector<16x1xf32>
    %192 = vector.broadcast %191 : vector<16x1xf32> to vector<16x32xf32>
    %193 = arith.mulf %183, %192 : vector<16x32xf32>
    %194 = vector.broadcast %175 : vector<1x32xf32> to vector<16x32xf32>
    %195 = arith.mulf %193, %194 : vector<16x32xf32>
    %196 = vector.broadcast %177 : vector<1x32xf32> to vector<16x32xf32>
    %197 = arith.addf %195, %196 : vector<16x32xf32>
    %198 = arith.truncf %197 : vector<16x32xf32> to vector<16x32xbf16>
    %c0_66 = arith.constant 0 : index
    %c0_67 = arith.constant 0 : index
    %c0_68 = arith.constant 0 : index
    %199 = vector.load %arg11[%c0_66, %c0_67, %c0_68] : memref<1x32x128xbf16, #tpu.memory_space<vmem>>, vector<1x32x128xbf16>
    %200 = vector.shape_cast %199 : vector<1x32x128xbf16> to vector<32x128xbf16>
    %cst_69 = arith.constant dense<0.000000e+00> : vector<16x128xf32>
    %201 = tpu.matmul %198, %200, %cst_69 {dimension_numbers = #tpu.dot_dimension_numbers<[1], [0], [0], [1], [0, 0, 1, 1], [], []>} : vector<16x32xbf16>, vector<32x128xbf16>, vector<16x128xf32> -> vector<16x128xf32>
    %c0_70 = arith.constant 0 : index
    %c0_71 = arith.constant 0 : index
    %c0_72 = arith.constant 0 : index
    %202 = vector.load %arg12[%c0_70, %c0_71, %c0_72] : memref<1x1x128xf32, #tpu.memory_space<vmem>>, vector<1x1x128xf32>
    %203 = vector.shape_cast %202 : vector<1x1x128xf32> to vector<1x128xf32>
    %204 = vector.broadcast %203 : vector<1x128xf32> to vector<16x128xf32>
    %205 = arith.addf %201, %204 : vector<16x128xf32>
    %cst_73 = arith.constant 5.000000e-01 : f32
    %206 = vector.broadcast %cst_73 : f32 to vector<16x128xf32>
    %207 = arith.mulf %206, %205 : vector<16x128xf32>
    %cst_74 = arith.constant 0.707106769 : f32
    %208 = vector.broadcast %cst_74 : f32 to vector<16x128xf32>
    %209 = arith.mulf %205, %208 : vector<16x128xf32>
    %210 = math.erf %209 : vector<16x128xf32>
    %cst_75 = arith.constant 1.000000e+00 : f32
    %211 = vector.broadcast %cst_75 : f32 to vector<16x128xf32>
    %212 = arith.addf %211, %210 : vector<16x128xf32>
    %213 = arith.mulf %207, %212 : vector<16x128xf32>
    %214 = arith.truncf %213 : vector<16x128xf32> to vector<16x128xbf16>
    %c0_76 = arith.constant 0 : index
    %c0_77 = arith.constant 0 : index
    %c0_78 = arith.constant 0 : index
    %215 = vector.load %arg13[%c0_76, %c0_77, %c0_78] : memref<1x128x32xbf16, #tpu.memory_space<vmem>>, vector<1x128x32xbf16>
    %216 = vector.shape_cast %215 : vector<1x128x32xbf16> to vector<128x32xbf16>
    %cst_79 = arith.constant dense<0.000000e+00> : vector<16x32xf32>
    %217 = tpu.matmul %214, %216, %cst_79 {dimension_numbers = #tpu.dot_dimension_numbers<[1], [0], [0], [1], [0, 0, 1, 1], [], []>} : vector<16x128xbf16>, vector<128x32xbf16>, vector<16x32xf32> -> vector<16x32xf32>
    %c0_80 = arith.constant 0 : index
    %c0_81 = arith.constant 0 : index
    %c0_82 = arith.constant 0 : index
    %218 = vector.load %arg14[%c0_80, %c0_81, %c0_82] : memref<1x1x32xf32, #tpu.memory_space<vmem>>, vector<1x1x32xf32>
    %219 = vector.shape_cast %218 : vector<1x1x32xf32> to vector<1x32xf32>
    %220 = vector.broadcast %219 : vector<1x32xf32> to vector<16x32xf32>
    %221 = arith.addf %217, %220 : vector<16x32xf32>
    %222 = arith.addf %173, %221 : vector<16x32xf32>
    %223 = vector.shape_cast %222 : vector<16x32xf32> to vector<2x8x32xf32>
    %c0_83 = arith.constant 0 : index
    %c0_84 = arith.constant 0 : index
    %c0_85 = arith.constant 0 : index
    %224 = vector.load %arg18[%c0_83, %c0_84, %c0_85] : memref<2x8x32xf32, #tpu.memory_space<vmem>>, vector<2x8x32xf32>
    tpu.vector_store %arg18[%c0_83, %c0_84, %c0_85], %223 {strides = array<i32>} : memref<2x8x32xf32, #tpu.memory_space<vmem>>, vector<2x8x32xf32>,
    %c1_i32 = arith.constant 1 : i32
    %225 = arith.cmpi eq, %arg1, %c1_i32 : i32
    %226 = arith.extui %225 : i1 to i32
    %c0_i32_86 = arith.constant 0 : i32
    %227 = arith.cmpi ne, %226, %c0_i32_86 : i32
    scf.if %227 {
      %228 = vector.shape_cast %222 : vector<16x32xf32> to vector<2x8x32xf32>
      %229 = vector.extract_strided_slice %228 {offsets = [0, 7, 0], sizes = [2, 1, 32], strides = [1, 1, 1]} : vector<2x8x32xf32> to vector<2x1x32xf32>
      %c0_87 = arith.constant 0 : index
      %c0_88 = arith.constant 0 : index
      %230 = vector.load %arg15[%c0_87, %c0_88] : memref<1x32xf32, #tpu.memory_space<vmem>>, vector<1x32xf32>
      %c0_89 = arith.constant 0 : index
      %c0_90 = arith.constant 0 : index
      %231 = vector.load %arg16[%c0_89, %c0_90] : memref<1x32xf32, #tpu.memory_space<vmem>>, vector<1x32xf32>
      %cst_91 = arith.constant dense<0.000000e+00> : vector<2x1xf32>
      %232 = vector.multi_reduction <add>, %229, %cst_91 [2] : vector<2x1x32xf32> to vector<2x1xf32>
      %233 = vector.shape_cast %232 : vector<2x1xf32> to vector<2x1x1xf32>
      %cst_92 = arith.constant 3.200000e+01 : f32
      %234 = vector.broadcast %cst_92 : f32 to vector<2x1x1xf32>
      %235 = arith.divf %233, %234 : vector<2x1x1xf32>
      %236 = vector.broadcast %235 : vector<2x1x1xf32> to vector<2x1x32xf32>
      %237 = arith.subf %229, %236 : vector<2x1x32xf32>
      %238 = arith.mulf %237, %237 : vector<2x1x32xf32>
      %cst_93 = arith.constant dense<0.000000e+00> : vector<2x1xf32>
      %239 = vector.multi_reduction <add>, %238, %cst_93 [2] : vector<2x1x32xf32> to vector<2x1xf32>
      %240 = vector.shape_cast %239 : vector<2x1xf32> to vector<2x1x1xf32>
      %cst_94 = arith.constant 3.200000e+01 : f32
      %241 = vector.broadcast %cst_94 : f32 to vector<2x1x1xf32>
      %242 = arith.divf %240, %241 : vector<2x1x1xf32>
      %cst_95 = arith.constant 9.99999974E-6 : f32
      %243 = vector.broadcast %cst_95 : f32 to vector<2x1x1xf32>
      %244 = arith.addf %242, %243 : vector<2x1x1xf32>
      %245 = math.rsqrt %244 : vector<2x1x1xf32>
      %246 = vector.broadcast %245 : vector<2x1x1xf32> to vector<2x1x32xf32>
      %247 = arith.mulf %237, %246 : vector<2x1x32xf32>
      %248 = vector.shape_cast %230 : vector<1x32xf32> to vector<1x1x32xf32>
      %249 = vector.broadcast %248 : vector<1x1x32xf32> to vector<2x1x32xf32>
      %250 = arith.mulf %247, %249 : vector<2x1x32xf32>
      %251 = vector.shape_cast %231 : vector<1x32xf32> to vector<1x1x32xf32>
      %252 = vector.broadcast %251 : vector<1x1x32xf32> to vector<2x1x32xf32>
      %253 = arith.addf %250, %252 : vector<2x1x32xf32>
      %c0_96 = arith.constant 0 : index
      %c0_97 = arith.constant 0 : index
      %c0_98 = arith.constant 0 : index
      %254 = vector.load %arg17[%c0_96, %c0_97, %c0_98] : memref<2x1x32xf32, #tpu.memory_space<vmem>>, vector<2x1x32xf32>
      tpu.vector_store %arg17[%c0_96, %c0_97, %c0_98], %253 {strides = array<i32>} : memref<2x1x32xf32, #tpu.memory_space<vmem>>, vector<2x1x32xf32>,
    } else {
    }
    return
  }
  func.func @transform_0(%arg0: i32, %arg1: i32) -> (i32, i32, i32) {
    %c0_i32 = arith.constant 0 : i32
    %c0_i32_0 = arith.constant 0 : i32
    %c0_i32_1 = arith.constant 0 : i32
    return %arg0, %c0_i32, %c0_i32_0 : i32, i32, i32
  }
  func.func @transform_1(%arg0: i32, %arg1: i32) -> (i32, i32, i32) {
    %c0_i32 = arith.constant 0 : i32
    %c0_i32_0 = arith.constant 0 : i32
    %c0_i32_1 = arith.constant 0 : i32
    return %arg1, %c0_i32, %c0_i32_0 : i32, i32, i32
  }
  func.func @transform_2(%arg0: i32, %arg1: i32) -> (i32, i32, i32) {
    %c0_i32 = arith.constant 0 : i32
    %c0_i32_0 = arith.constant 0 : i32
    %c0_i32_1 = arith.constant 0 : i32
    return %arg1, %c0_i32, %c0_i32_0 : i32, i32, i32
  }
  func.func @transform_3(%arg0: i32, %arg1: i32) -> (i32, i32, i32) {
    %c0_i32 = arith.constant 0 : i32
    %c0_i32_0 = arith.constant 0 : i32
    %c0_i32_1 = arith.constant 0 : i32
    return %arg1, %c0_i32, %c0_i32_0 : i32, i32, i32
  }
  func.func @transform_4(%arg0: i32, %arg1: i32) -> (i32, i32, i32) {
    %c0_i32 = arith.constant 0 : i32
    %c0_i32_0 = arith.constant 0 : i32
    %c0_i32_1 = arith.constant 0 : i32
    return %arg1, %c0_i32, %c0_i32_0 : i32, i32, i32
  }
  func.func @transform_5(%arg0: i32, %arg1: i32) -> (i32, i32, i32) {
    %c0_i32 = arith.constant 0 : i32
    %c0_i32_0 = arith.constant 0 : i32
    %c0_i32_1 = arith.constant 0 : i32
    return %arg1, %c0_i32, %c0_i32_0 : i32, i32, i32
  }
  func.func @transform_6(%arg0: i32, %arg1: i32) -> (i32, i32, i32) {
    %c0_i32 = arith.constant 0 : i32
    %c0_i32_0 = arith.constant 0 : i32
    %c0_i32_1 = arith.constant 0 : i32
    return %arg1, %c0_i32, %c0_i32_0 : i32, i32, i32
  }
  func.func @transform_7(%arg0: i32, %arg1: i32) -> (i32, i32, i32) {
    %c0_i32 = arith.constant 0 : i32
    %c0_i32_0 = arith.constant 0 : i32
    %c0_i32_1 = arith.constant 0 : i32
    return %arg1, %c0_i32, %c0_i32_0 : i32, i32, i32
  }
  func.func @transform_8(%arg0: i32, %arg1: i32) -> (i32, i32, i32) {
    %c0_i32 = arith.constant 0 : i32
    %c0_i32_0 = arith.constant 0 : i32
    %c0_i32_1 = arith.constant 0 : i32
    return %arg1, %c0_i32, %c0_i32_0 : i32, i32, i32
  }
  func.func @transform_9(%arg0: i32, %arg1: i32) -> (i32, i32, i32) {
    %c0_i32 = arith.constant 0 : i32
    %c0_i32_0 = arith.constant 0 : i32
    %c0_i32_1 = arith.constant 0 : i32
    return %arg1, %c0_i32, %c0_i32_0 : i32, i32, i32
  }
  func.func @transform_10(%arg0: i32, %arg1: i32) -> (i32, i32, i32) {
    %c0_i32 = arith.constant 0 : i32
    %c0_i32_0 = arith.constant 0 : i32
    %c0_i32_1 = arith.constant 0 : i32
    return %arg1, %c0_i32, %c0_i32_0 : i32, i32, i32
  }
  func.func @transform_11(%arg0: i32, %arg1: i32) -> (i32, i32, i32) {
    %c0_i32 = arith.constant 0 : i32
    %c0_i32_0 = arith.constant 0 : i32
    %c0_i32_1 = arith.constant 0 : i32
    return %arg1, %c0_i32, %c0_i32_0 : i32, i32, i32
  }
  func.func @transform_12(%arg0: i32, %arg1: i32) -> (i32, i32, i32) {
    %c0_i32 = arith.constant 0 : i32
    %c0_i32_0 = arith.constant 0 : i32
    %c0_i32_1 = arith.constant 0 : i32
    return %arg1, %c0_i32, %c0_i32_0 : i32, i32, i32
  }
  func.func @transform_13(%arg0: i32, %arg1: i32) -> (i32, i32) {
    %c0_i32 = arith.constant 0 : i32
    %c0_i32_0 = arith.constant 0 : i32
    %c0_i32_1 = arith.constant 0 : i32
    return %c0_i32, %c0_i32_0 : i32, i32
  }
  func.func @transform_14(%arg0: i32, %arg1: i32) -> (i32, i32) {
    %c0_i32 = arith.constant 0 : i32
    %c0_i32_0 = arith.constant 0 : i32
    %c0_i32_1 = arith.constant 0 : i32
    return %c0_i32, %c0_i32_0 : i32, i32
  }
  func.func @transform_15(%arg0: i32, %arg1: i32) -> (i32, i32, i32) {
    %c0_i32 = arith.constant 0 : i32
    %c0_i32_0 = arith.constant 0 : i32
    %c0_i32_1 = arith.constant 0 : i32
    return %arg0, %c0_i32, %c0_i32_0 : i32, i32, i32
  }
}

</mosaic_0001>

<llo_original>
// kernel: tpu_custom_call.1
$region0: #{tpu_custom_call.1}
  #allocation0 [shape = 'u32[]', space=smem, size = 0x4, offset = 0x4, fixed_abs, tag = 'smem constant byte address 0x4 - core index']
  #allocation1 [shape = 'u32[72,128]{1,0:T(1,128)}', space=vmem, size = 0x9000, scoped, tag = 'internal scratch']
  #allocation2 [shape = 'f32[2,8,32]{2,1,0:T(8,128)}', space=vmem, size = 0x2000, scoped, tag = 'scratch operand']
  %s0 = inlined_call_operand.vmem [shape: f32[2,8,32], index: 0, kind: input, shape index: {}]
  %s1 = inlined_call_operand.vmem [shape: f32[2,1,32], index: 1, kind: input, shape index: {}]
  %s2 = inlined_call_operand.vmem [shape: f32[2,1,32], index: 2, kind: input, shape index: {}]
  %s3 = inlined_call_operand.vmem [shape: bf16[2,32,96], index: 3, kind: input, shape index: {}]
  %s4 = inlined_call_operand.vmem [shape: f32[2,1,96], index: 4, kind: input, shape index: {}]
  %s5 = inlined_call_operand.vmem [shape: bf16[2,32,32], index: 5, kind: input, shape index: {}]
  %s6 = inlined_call_operand.vmem [shape: f32[2,1,32], index: 6, kind: input, shape index: {}]
  %s7 = inlined_call_operand.vmem [shape: f32[2,1,32], index: 7, kind: input, shape index: {}]
  %s8 = inlined_call_operand.vmem [shape: f32[2,1,32], index: 8, kind: input, shape index: {}]
  %s9 = inlined_call_operand.vmem [shape: bf16[2,32,128], index: 9, kind: input, shape index: {}]
  %s10 = inlined_call_operand.vmem [shape: f32[2,1,128], index: 10, kind: input, shape index: {}]
  %s11 = inlined_call_operand.vmem [shape: bf16[2,128,32], index: 11, kind: input, shape index: {}]
  %s12 = inlined_call_operand.vmem [shape: f32[2,1,32], index: 12, kind: input, shape index: {}]
  %s13 = inlined_call_operand.vmem [shape: f32[1,32], index: 13, kind: input, shape index: {}]
  %s14 = inlined_call_operand.vmem [shape: f32[1,32], index: 14, kind: input, shape index: {}]
  %s15 = inlined_call_operand.hbm [shape: f32[2,1,32], index: 15, kind: output, shape index: {}]
  %s16 = sld [smem:[#allocation0]]
  $region101: #{tpu_custom_call.1} parent=0
    _
  %s18 = ssub.s32 1, %s16
  %s19 = scalar_select 0, %s18, %s16
  $region1: #{tpu_custom_call.1} parent=0
    #allocation3 [shape = 'u8[1024]{0}', space=vmem, size = 0x400, scoped, tag = 'output window, operand 0, single buffered']
    #allocation4 [shape = 's32[2]{0}', space=sflag, size = 0x8, scoped, tag = 'scoped memory for tpu_custom_call.1']
    %20 = vsyncpa [#allocation4], 0
    loop: start=0, step=1, limit=4
    $region2: #{tpu_custom_call.1} parent=1 // loop_pre_header
      _
    $region3: #{tpu_custom_call.1} parent=1 // loop_header
      %s22 = sphi 0, %s26
      %p23 = scmp.ge.s32.totalorder %s22, 4
      %s29 = sphi 0, %s41
      %s30 = sphi 0, %s37
      %s31 = sphi 0, %s29
      %s32 = sphi 0, %s30
      %s33 = sphi 0, %s31
      %s34 = sphi 0, %s32
      %s44 = sphi 0, %s46
      %s47 = sphi 0, %s44
      %s48 = sphi 0, %s47
      %s64 = sphi 0, %s48
      %s70 = sphi 0, %s72
      %s73 = sphi 0, %s70
      %s74 = sphi 0, %s73
      %s90 = sphi 0, %s74
      %s96 = sphi 0, %s98
      %s99 = sphi 0, %s96
      %s100 = sphi 0, %s99
      %s116 = sphi 0, %s100
      %s122 = sphi 0, %s124
      %s125 = sphi 0, %s122
      %s126 = sphi 0, %s125
      %s142 = sphi 0, %s126
      %s148 = sphi 0, %s150
      %s151 = sphi 0, %s148
      %s152 = sphi 0, %s151
      %s168 = sphi 0, %s152
      %s174 = sphi 0, %s176
      %s177 = sphi 0, %s174
      %s178 = sphi 0, %s177
      %s194 = sphi 0, %s178
      %s200 = sphi 0, %s202
      %s203 = sphi 0, %s200
      %s204 = sphi 0, %s203
      %s220 = sphi 0, %s204
      %s226 = sphi 0, %s228
      %s229 = sphi 0, %s226
      %s230 = sphi 0, %s229
      %s246 = sphi 0, %s230
      %s252 = sphi 0, %s254
      %s255 = sphi 0, %s252
      %s256 = sphi 0, %s255
      %s272 = sphi 0, %s256
      %s278 = sphi 0, %s280
      %s281 = sphi 0, %s278
      %s282 = sphi 0, %s281
      %s298 = sphi 0, %s282
      %s304 = sphi 0, %s306
      %s307 = sphi 0, %s304
      %s308 = sphi 0, %s307
      %s324 = sphi 0, %s308
      %s330 = sphi 0, %s332
      %s333 = sphi 0, %s330
      %s334 = sphi 0, %s333
      %s350 = sphi 0, %s334
      %s356 = sphi 0, %s358
      %s359 = sphi 0, %s356
      %s360 = sphi 0, %s359
      %s376 = sphi 0, %s360
      %s380 = sphi 0, %s380
      %s382 = sphi 0, %s380
      %s383 = sphi 0, %s382
      %s397 = sphi 0, %s383
      %s401 = sphi 0, %s401
      %s403 = sphi 0, %s401
      %s404 = sphi 0, %s403
      %s418 = sphi 0, %s404
      %s424 = sphi 0, %s426
      %s427 = sphi 0, %s424
      %s428 = sphi 0, %s427
      %s444 = sphi 0, %s428
    $region4: #{tpu_custom_call.1} parent=1 // loop_header_branch
      %25 = sbr.rel (%p23) target = $region8
    $region5: #{tpu_custom_call.1} parent=1 // loop_body
      %s27 = ssub.s32 %s22, 1
      %s28 = ssub.s32 %s22, 2
      %s35 = sadd.s32 1, %s30
      %p36 = scmp.ge.s32.totalorder %s35, 2
      %s37 = scalar_select %p36, 0, %s35
      %s38 = sadd.s32 1, %s29
      %s39 = scalar_select %p36, %s38, %s29
      %p40 = scmp.ge.s32.totalorder %s39, 1
      %s41 = scalar_select %p40, 0, %s39
      %s42 = ssub.s32 %s29, %s41
      %p43 = scmp.eq.s32.totalorder %s42, 0
      %s45 = sadd.s32 %s44, 1
      %s46 = scalar_select %p43, %s44, %s45
      %p49 = pneg %p43
      %p50 = scmp.eq.s32.totalorder %s22, 1
      %p51 = por %p49, %p50
      %p52 = scmp.ne.s32.totalorder %s44, %s47
      %p53 = scmp.eq.s32.totalorder %s22, 0
      %p54 = por %p52, %p53
      %p55 = scmp.ne.s32.totalorder %s44, %s47
      %p56 = scmp.eq.s32.totalorder %s27, 1
      %p57 = por %p55, %p56
      %p58 = scmp.ne.s32.totalorder %s47, %s48
      %p59 = scmp.eq.s32.totalorder %s27, 0
      %p60 = por %p58, %p59
      %p61 = scmp.ne.s32.totalorder %s47, %s48
      %p62 = scmp.eq.s32.totalorder %s28, 1
      %p63 = por %p61, %p62
      %p65 = scmp.ne.s32.totalorder %s48, %s64
      %p66 = scmp.eq.s32.totalorder %s28, 0
      %p67 = por %p65, %p66
      %s68 = ssub.s32 %s30, %s37
      %p69 = scmp.eq.s32.totalorder %s68, 0
      %s71 = sadd.s32 %s70, 1
      %s72 = scalar_select %p69, %s70, %s71
      %p75 = pneg %p69
      %p76 = scmp.eq.s32.totalorder %s22, 1
      %p77 = por %p75, %p76
      %p78 = scmp.ne.s32.totalorder %s70, %s73
      %p79 = scmp.eq.s32.totalorder %s22, 0
      %p80 = por %p78, %p79
      %p81 = scmp.ne.s32.totalorder %s70, %s73
      %p82 = scmp.eq.s32.totalorder %s27, 1
      %p83 = por %p81, %p82
      %p84 = scmp.ne.s32.totalorder %s73, %s74
      %p85 = scmp.eq.s32.totalorder %s27, 0
      %p86 = por %p84, %p85
      %p87 = scmp.ne.s32.totalorder %s73, %s74
      %p88 = scmp.eq.s32.totalorder %s28, 1
      %p89 = por %p87, %p88
      %p91 = scmp.ne.s32.totalorder %s74, %s90
      %p92 = scmp.eq.s32.totalorder %s28, 0
      %p93 = por %p91, %p92
      %s94 = ssub.s32 %s30, %s37
      %p95 = scmp.eq.s32.totalorder %s94, 0
      %s97 = sadd.s32 %s96, 1
      %s98 = scalar_select %p95, %s96, %s97
      %p101 = pneg %p95
      %p102 = scmp.eq.s32.totalorder %s22, 1
      %p103 = por %p101, %p102
      %p104 = scmp.ne.s32.totalorder %s96, %s99
      %p105 = scmp.eq.s32.totalorder %s22, 0
      %p106 = por %p104, %p105
      %p107 = scmp.ne.s32.totalorder %s96, %s99
      %p108 = scmp.eq.s32.totalorder %s27, 1
      %p109 = por %p107, %p108
      %p110 = scmp.ne.s32.totalorder %s99, %s100
      %p111 = scmp.eq.s32.totalorder %s27, 0
      %p112 = por %p110, %p111
      %p113 = scmp.ne.s32.totalorder %s99, %s100
      %p114 = scmp.eq.s32.totalorder %s28, 1
      %p115 = por %p113, %p114
      %p117 = scmp.ne.s32.totalorder %s100, %s116
      %p118 = scmp.eq.s32.totalorder %s28, 0
      %p119 = por %p117, %p118
      %s120 = ssub.s32 %s30, %s37
      %p121 = scmp.eq.s32.totalorder %s120, 0
      %s123 = sadd.s32 %s122, 1
      %s124 = scalar_select %p121, %s122, %s123
      %p127 = pneg %p121
      %p128 = scmp.eq.s32.totalorder %s22, 1
      %p129 = por %p127, %p128
      %p130 = scmp.ne.s32.totalorder %s122, %s125
      %p131 = scmp.eq.s32.totalorder %s22, 0
      %p132 = por %p130, %p131
      %p133 = scmp.ne.s32.totalorder %s122, %s125
      %p134 = scmp.eq.s32.totalorder %s27, 1
      %p135 = por %p133, %p134
      %p136 = scmp.ne.s32.totalorder %s125, %s126
      %p137 = scmp.eq.s32.totalorder %s27, 0
      %p138 = por %p136, %p137
      %p139 = scmp.ne.s32.totalorder %s125, %s126
      %p140 = scmp.eq.s32.totalorder %s28, 1
      %p141 = por %p139, %p140
      %p143 = scmp.ne.s32.totalorder %s126, %s142
      %p144 = scmp.eq.s32.totalorder %s28, 0
      %p145 = por %p143, %p144
      %s146 = ssub.s32 %s30, %s37
      %p147 = scmp.eq.s32.totalorder %s146, 0
      %s149 = sadd.s32 %s148, 1
      %s150 = scalar_select %p147, %s148, %s149
      %p153 = pneg %p147
      %p154 = scmp.eq.s32.totalorder %s22, 1
      %p155 = por %p153, %p154
      %p156 = scmp.ne.s32.totalorder %s148, %s151
      %p157 = scmp.eq.s32.totalorder %s22, 0
      %p158 = por %p156, %p157
      %p159 = scmp.ne.s32.totalorder %s148, %s151
      %p160 = scmp.eq.s32.totalorder %s27, 1
      %p161 = por %p159, %p160
      %p162 = scmp.ne.s32.totalorder %s151, %s152
      %p163 = scmp.eq.s32.totalorder %s27, 0
      %p164 = por %p162, %p163
      %p165 = scmp.ne.s32.totalorder %s151, %s152
      %p166 = scmp.eq.s32.totalorder %s28, 1
      %p167 = por %p165, %p166
      %p169 = scmp.ne.s32.totalorder %s152, %s168
      %p170 = scmp.eq.s32.totalorder %s28, 0
      %p171 = por %p169, %p170
      %s172 = ssub.s32 %s30, %s37
      %p173 = scmp.eq.s32.totalorder %s172, 0
      %s175 = sadd.s32 %s174, 1
      %s176 = scalar_select %p173, %s174, %s175
      %p179 = pneg %p173
      %p180 = scmp.eq.s32.totalorder %s22, 1
      %p181 = por %p179, %p180
      %p182 = scmp.ne.s32.totalorder %s174, %s177
      %p183 = scmp.eq.s32.totalorder %s22, 0
      %p184 = por %p182, %p183
      %p185 = scmp.ne.s32.totalorder %s174, %s177
      %p186 = scmp.eq.s32.totalorder %s27, 1
      %p187 = por %p185, %p186
      %p188 = scmp.ne.s32.totalorder %s177, %s178
      %p189 = scmp.eq.s32.totalorder %s27, 0
      %p190 = por %p188, %p189
      %p191 = scmp.ne.s32.totalorder %s177, %s178
      %p192 = scmp.eq.s32.totalorder %s28, 1
      %p193 = por %p191, %p192
      %p195 = scmp.ne.s32.totalorder %s178, %s194
      %p196 = scmp.eq.s32.totalorder %s28, 0
      %p197 = por %p195, %p196
      %s198 = ssub.s32 %s30, %s37
      %p199 = scmp.eq.s32.totalorder %s198, 0
      %s201 = sadd.s32 %s200, 1
      %s202 = scalar_select %p199, %s200, %s201
      %p205 = pneg %p199
      %p206 = scmp.eq.s32.totalorder %s22, 1
      %p207 = por %p205, %p206
      %p208 = scmp.ne.s32.totalorder %s200, %s203
      %p209 = scmp.eq.s32.totalorder %s22, 0
      %p210 = por %p208, %p209
      %p211 = scmp.ne.s32.totalorder %s200, %s203
      %p212 = scmp.eq.s32.totalorder %s27, 1
      %p213 = por %p211, %p212
      %p214 = scmp.ne.s32.totalorder %s203, %s204
      %p215 = scmp.eq.s32.totalorder %s27, 0
      %p216 = por %p214, %p215
      %p217 = scmp.ne.s32.totalorder %s203, %s204
      %p218 = scmp.eq.s32.totalorder %s28, 1
      %p219 = por %p217, %p218
      %p221 = scmp.ne.s32.totalorder %s204, %s220
      %p222 = scmp.eq.s32.totalorder %s28, 0
      %p223 = por %p221, %p222
      %s224 = ssub.s32 %s30, %s37
      %p225 = scmp.eq.s32.totalorder %s224, 0
      %s227 = sadd.s32 %s226, 1
      %s228 = scalar_select %p225, %s226, %s227
      %p231 = pneg %p225
      %p232 = scmp.eq.s32.totalorder %s22, 1
      %p233 = por %p231, %p232
      %p234 = scmp.ne.s32.totalorder %s226, %s229
      %p235 = scmp.eq.s32.totalorder %s22, 0
      %p236 = por %p234, %p235
      %p237 = scmp.ne.s32.totalorder %s226, %s229
      %p238 = scmp.eq.s32.totalorder %s27, 1
      %p239 = por %p237, %p238
      %p240 = scmp.ne.s32.totalorder %s229, %s230
      %p241 = scmp.eq.s32.totalorder %s27, 0
      %p242 = por %p240, %p241
      %p243 = scmp.ne.s32.totalorder %s229, %s230
      %p244 = scmp.eq.s32.totalorder %s28, 1
      %p245 = por %p243, %p244
      %p247 = scmp.ne.s32.totalorder %s230, %s246
      %p248 = scmp.eq.s32.totalorder %s28, 0
      %p249 = por %p247, %p248
      %s250 = ssub.s32 %s30, %s37
      %p251 = scmp.eq.s32.totalorder %s250, 0
      %s253 = sadd.s32 %s252, 1
      %s254 = scalar_select %p251, %s252, %s253
      %p257 = pneg %p251
      %p258 = scmp.eq.s32.totalorder %s22, 1
      %p259 = por %p257, %p258
      %p260 = scmp.ne.s32.totalorder %s252, %s255
      %p261 = scmp.eq.s32.totalorder %s22, 0
      %p262 = por %p260, %p261
      %p263 = scmp.ne.s32.totalorder %s252, %s255
      %p264 = scmp.eq.s32.totalorder %s27, 1
      %p265 = por %p263, %p264
      %p266 = scmp.ne.s32.totalorder %s255, %s256
      %p267 = scmp.eq.s32.totalorder %s27, 0
      %p268 = por %p266, %p267
      %p269 = scmp.ne.s32.totalorder %s255, %s256
      %p270 = scmp.eq.s32.totalorder %s28, 1
      %p271 = por %p269, %p270
      %p273 = scmp.ne.s32.totalorder %s256, %s272
      %p274 = scmp.eq.s32.totalorder %s28, 0
      %p275 = por %p273, %p274
      %s276 = ssub.s32 %s30, %s37
      %p277 = scmp.eq.s32.totalorder %s276, 0
      %s279 = sadd.s32 %s278, 1
      %s280 = scalar_select %p277, %s278, %s279
      %p283 = pneg %p277
      %p284 = scmp.eq.s32.totalorder %s22, 1
      %p285 = por %p283, %p284
      %p286 = scmp.ne.s32.totalorder %s278, %s281
      %p287 = scmp.eq.s32.totalorder %s22, 0
      %p288 = por %p286, %p287
      %p289 = scmp.ne.s32.totalorder %s278, %s281
      %p290 = scmp.eq.s32.totalorder %s27, 1
      %p291 = por %p289, %p290
      %p292 = scmp.ne.s32.totalorder %s281, %s282
      %p293 = scmp.eq.s32.totalorder %s27, 0
      %p294 = por %p292, %p293
      %p295 = scmp.ne.s32.totalorder %s281, %s282
      %p296 = scmp.eq.s32.totalorder %s28, 1
      %p297 = por %p295, %p296
      %p299 = scmp.ne.s32.totalorder %s282, %s298
      %p300 = scmp.eq.s32.totalorder %s28, 0
      %p301 = por %p299, %p300
      %s302 = ssub.s32 %s30, %s37
      %p303 = scmp.eq.s32.totalorder %s302, 0
      %s305 = sadd.s32 %s304, 1
      %s306 = scalar_select %p303, %s304, %s305
      %p309 = pneg %p303
      %p310 = scmp.eq.s32.totalorder %s22, 1
      %p311 = por %p309, %p310
      %p312 = scmp.ne.s32.totalorder %s304, %s307
      %p313 = scmp.eq.s32.totalorder %s22, 0
      %p314 = por %p312, %p313
      %p315 = scmp.ne.s32.totalorder %s304, %s307
      %p316 = scmp.eq.s32.totalorder %s27, 1
      %p317 = por %p315, %p316
      %p318 = scmp.ne.s32.totalorder %s307, %s308
      %p319 = scmp.eq.s32.totalorder %s27, 0
      %p320 = por %p318, %p319
      %p321 = scmp.ne.s32.totalorder %s307, %s308
      %p322 = scmp.eq.s32.totalorder %s28, 1
      %p323 = por %p321, %p322
      %p325 = scmp.ne.s32.totalorder %s308, %s324
      %p326 = scmp.eq.s32.totalorder %s28, 0
      %p327 = por %p325, %p326
      %s328 = ssub.s32 %s30, %s37
      %p329 = scmp.eq.s32.totalorder %s328, 0
      %s331 = sadd.s32 %s330, 1
      %s332 = scalar_select %p329, %s330, %s331
      %p335 = pneg %p329
      %p336 = scmp.eq.s32.totalorder %s22, 1
      %p337 = por %p335, %p336
      %p338 = scmp.ne.s32.totalorder %s330, %s333
      %p339 = scmp.eq.s32.totalorder %s22, 0
      %p340 = por %p338, %p339
      %p341 = scmp.ne.s32.totalorder %s330, %s333
      %p342 = scmp.eq.s32.totalorder %s27, 1
      %p343 = por %p341, %p342
      %p344 = scmp.ne.s32.totalorder %s333, %s334
      %p345 = scmp.eq.s32.totalorder %s27, 0
      %p346 = por %p344, %p345
      %p347 = scmp.ne.s32.totalorder %s333, %s334
      %p348 = scmp.eq.s32.totalorder %s28, 1
      %p349 = por %p347, %p348
      %p351 = scmp.ne.s32.totalorder %s334, %s350
      %p352 = scmp.eq.s32.totalorder %s28, 0
      %p353 = por %p351, %p352
      %s354 = ssub.s32 %s30, %s37
      %p355 = scmp.eq.s32.totalorder %s354, 0
      %s357 = sadd.s32 %s356, 1
      %s358 = scalar_select %p355, %s356, %s357
      %p361 = pneg %p355
      %p362 = scmp.eq.s32.totalorder %s22, 1
      %p363 = por %p361, %p362
      %p364 = scmp.ne.s32.totalorder %s356, %s359
      %p365 = scmp.eq.s32.totalorder %s22, 0
      %p366 = por %p364, %p365
      %p367 = scmp.ne.s32.totalorder %s356, %s359
      %p368 = scmp.eq.s32.totalorder %s27, 1
      %p369 = por %p367, %p368
      %p370 = scmp.ne.s32.totalorder %s359, %s360
      %p371 = scmp.eq.s32.totalorder %s27, 0
      %p372 = por %p370, %p371
      %p373 = scmp.ne.s32.totalorder %s359, %s360
      %p374 = scmp.eq.s32.totalorder %s28, 1
      %p375 = por %p373, %p374
      %p377 = scmp.ne.s32.totalorder %s360, %s376
      %p378 = scmp.eq.s32.totalorder %s28, 0
      %p379 = por %p377, %p378
      %s381 = sadd.s32 %s380, 1
      %p384 = scmp.eq.s32.totalorder %s22, 1
      %p385 = scmp.ne.s32.totalorder %s380, %s382
      %p386 = scmp.eq.s32.totalorder %s22, 0
      %p387 = por %p385, %p386
      %p388 = scmp.ne.s32.totalorder %s380, %s382
      %p389 = scmp.eq.s32.totalorder %s27, 1
      %p390 = por %p388, %p389
      %p391 = scmp.ne.s32.totalorder %s382, %s383
      %p392 = scmp.eq.s32.totalorder %s27, 0
      %p393 = por %p391, %p392
      %p394 = scmp.ne.s32.totalorder %s382, %s383
      %p395 = scmp.eq.s32.totalorder %s28, 1
      %p396 = por %p394, %p395
      %p398 = scmp.ne.s32.totalorder %s383, %s397
      %p399 = scmp.eq.s32.totalorder %s28, 0
      %p400 = por %p398, %p399
      %s402 = sadd.s32 %s401, 1
      %p405 = scmp.eq.s32.totalorder %s22, 1
      %p406 = scmp.ne.s32.totalorder %s401, %s403
      %p407 = scmp.eq.s32.totalorder %s22, 0
      %p408 = por %p406, %p407
      %p409 = scmp.ne.s32.totalorder %s401, %s403
      %p410 = scmp.eq.s32.totalorder %s27, 1
      %p411 = por %p409, %p410
      %p412 = scmp.ne.s32.totalorder %s403, %s404
      %p413 = scmp.eq.s32.totalorder %s27, 0
      %p414 = por %p412, %p413
      %p415 = scmp.ne.s32.totalorder %s403, %s404
      %p416 = scmp.eq.s32.totalorder %s28, 1
      %p417 = por %p415, %p416
      %p419 = scmp.ne.s32.totalorder %s404, %s418
      %p420 = scmp.eq.s32.totalorder %s28, 0
      %p421 = por %p419, %p420
      %s422 = ssub.s32 %s29, %s41
      %p423 = scmp.eq.s32.totalorder %s422, 0
      %s425 = sadd.s32 %s424, 1
      %s426 = scalar_select %p423, %s424, %s425
      %p429 = pneg %p423
      %p430 = scmp.eq.s32.totalorder %s22, 1
      %p431 = por %p429, %p430
      %p432 = scmp.ne.s32.totalorder %s424, %s427
      %p433 = scmp.eq.s32.totalorder %s22, 0
      %p434 = por %p432, %p433
      %p435 = scmp.ne.s32.totalorder %s424, %s427
      %p436 = scmp.eq.s32.totalorder %s27, 1
      %p437 = por %p435, %p436
      %p438 = scmp.ne.s32.totalorder %s427, %s428
      %p439 = scmp.eq.s32.totalorder %s27, 0
      %p440 = por %p438, %p439
      %p441 = scmp.ne.s32.totalorder %s427, %s428
      %p442 = scmp.eq.s32.totalorder %s28, 1
      %p443 = por %p441, %p442
      %p445 = scmp.ne.s32.totalorder %s428, %s444
      %p446 = scmp.eq.s32.totalorder %s28, 0
      %p447 = por %p445, %p446
      %p448 = scmp.le.s32.totalorder 1, %s22
      %p449 = scmp.lt.s32.totalorder %s22, 3
      %p450 = pnand %p448, %p449
      %p451 = pneg %p450
      // Predicated region
      $region9: #{tpu_custom_call.1} parent=5 // pred_check
        _
      $region10: #{tpu_custom_call.1} parent=5 // pred_check_branch
        %453 = sbr.rel (%p450) target = $region12
      $region11: #{tpu_custom_call.1} parent=5 // pred_region
        %s454 = ssub.s32 %s22, 1
        // Predicated region
        $region13: #{tpu_custom_call.1} parent=11 // pred_check
          %p455 = pneg %p60
        $region14: #{tpu_custom_call.1} parent=11 // pred_check_branch
          %457 = sbr.rel (%p455) target = $region16
        $region15: #{tpu_custom_call.1} parent=11 // pred_region
          %s458 = smul.u32 2, %s31
          %p459 = scmp.lt.s32.totalorder %s458, 1
          %s460 = scalar_select %p459, %s458, 1
          %s461 = smul.addr %s460, 8
          %s462 = scalar_lea.vmem %s0, %s461
          %s463 = smul.u32 2, %s31
        $region16: #{tpu_custom_call.1} parent=11 // pred_fallthru
          _
        // Predicated region
        $region17: #{tpu_custom_call.1} parent=11 // pred_check
          %p464 = pneg %p393
        $region18: #{tpu_custom_call.1} parent=11 // pred_check_branch
          %466 = sbr.rel (%p464) target = $region20
        $region19: #{tpu_custom_call.1} parent=11 // pred_region
          _
        $region20: #{tpu_custom_call.1} parent=11 // pred_fallthru
          _
        // Predicated region
        $region21: #{tpu_custom_call.1} parent=11 // pred_check
          %p467 = pneg %p414
        $region22: #{tpu_custom_call.1} parent=11 // pred_check_branch
          %469 = sbr.rel (%p467) target = $region24
        $region23: #{tpu_custom_call.1} parent=11 // pred_region
          _
        $region24: #{tpu_custom_call.1} parent=11 // pred_fallthru
          _
      $region12: #{tpu_custom_call.1} parent=5 // pred_fallthru
        _
      %p470 = scmp.lt.s32.totalorder %s22, 2
      // Predicated region
      $region25: #{tpu_custom_call.1} parent=5 // pred_check
        %p471 = pneg %p470
      $region26: #{tpu_custom_call.1} parent=5 // pred_check_branch
        %473 = sbr.rel (%p471) target = $region28
      $region27: #{tpu_custom_call.1} parent=5 // pred_region
        // Predicated region
        $region29: #{tpu_custom_call.1} parent=27 // pred_check
          %p474 = pneg %p80
        $region30: #{tpu_custom_call.1} parent=27 // pred_check_branch
          %476 = sbr.rel (%p474) target = $region32
        $region31: #{tpu_custom_call.1} parent=27 // pred_region
          %p477 = scmp.lt.s32.totalorder %s30, 1
          %s478 = scalar_select %p477, %s30, 1
          %s479 = scalar_lea.vmem %s1, %s478
        $region32: #{tpu_custom_call.1} parent=27 // pred_fallthru
          _
        // Predicated region
        $region33: #{tpu_custom_call.1} parent=27 // pred_check
          %p480 = pneg %p106
        $region34: #{tpu_custom_call.1} parent=27 // pred_check_branch
          %482 = sbr.rel (%p480) target = $region36
        $region35: #{tpu_custom_call.1} parent=27 // pred_region
          %p483 = scmp.lt.s32.totalorder %s30, 1
          %s484 = scalar_select %p483, %s30, 1
          %s485 = scalar_lea.vmem %s2, %s484
        $region36: #{tpu_custom_call.1} parent=27 // pred_fallthru
          _
        // Predicated region
        $region37: #{tpu_custom_call.1} parent=27 // pred_check
          %p486 = pneg %p132
        $region38: #{tpu_custom_call.1} parent=27 // pred_check_branch
          %488 = sbr.rel (%p486) target = $region40
        $region39: #{tpu_custom_call.1} parent=27 // pred_region
          %p489 = scmp.lt.s32.totalorder %s30, 1
          %s490 = scalar_select %p489, %s30, 1
          %s491 = smul.addr %s490, 4
          %s492 = smul.addr %s491, 4
          %s493 = scalar_lea.vmem %s3, %s492
        $region40: #{tpu_custom_call.1} parent=27 // pred_fallthru
          _
        // Predicated region
        $region41: #{tpu_custom_call.1} parent=27 // pred_check
          %p494 = pneg %p158
        $region42: #{tpu_custom_call.1} parent=27 // pred_check_branch
          %496 = sbr.rel (%p494) target = $region44
        $region43: #{tpu_custom_call.1} parent=27 // pred_region
          %p497 = scmp.lt.s32.totalorder %s30, 1
          %s498 = scalar_select %p497, %s30, 1
          %s499 = scalar_lea.vmem %s4, %s498
        $region44: #{tpu_custom_call.1} parent=27 // pred_fallthru
          _
        // Predicated region
        $region45: #{tpu_custom_call.1} parent=27 // pred_check
          %p500 = pneg %p184
        $region46: #{tpu_custom_call.1} parent=27 // pred_check_branch
          %502 = sbr.rel (%p500) target = $region48
        $region47: #{tpu_custom_call.1} parent=27 // pred_region
          %p503 = scmp.lt.s32.totalorder %s30, 1
          %s504 = scalar_select %p503, %s30, 1
          %s505 = smul.addr %s504, 4
          %s506 = smul.addr %s505, 4
          %s507 = scalar_lea.vmem %s5, %s506
        $region48: #{tpu_custom_call.1} parent=27 // pred_fallthru
          _
        // Predicated region
        $region49: #{tpu_custom_call.1} parent=27 // pred_check
          %p508 = pneg %p210
        $region50: #{tpu_custom_call.1} parent=27 // pred_check_branch
          %510 = sbr.rel (%p508) target = $region52
        $region51: #{tpu_custom_call.1} parent=27 // pred_region
          %p511 = scmp.lt.s32.totalorder %s30, 1
          %s512 = scalar_select %p511, %s30, 1
          %s513 = scalar_lea.vmem %s6, %s512
        $region52: #{tpu_custom_call.1} parent=27 // pred_fallthru
          _
        // Predicated region
        $region53: #{tpu_custom_call.1} parent=27 // pred_check
          %p514 = pneg %p236
        $region54: #{tpu_custom_call.1} parent=27 // pred_check_branch
          %516 = sbr.rel (%p514) target = $region56
        $region55: #{tpu_custom_call.1} parent=27 // pred_region
          %p517 = scmp.lt.s32.totalorder %s30, 1
          %s518 = scalar_select %p517, %s30, 1
          %s519 = scalar_lea.vmem %s7, %s518
        $region56: #{tpu_custom_call.1} parent=27 // pred_fallthru
          _
        // Predicated region
        $region57: #{tpu_custom_call.1} parent=27 // pred_check
          %p520 = pneg %p262
        $region58: #{tpu_custom_call.1} parent=27 // pred_check_branch
          %522 = sbr.rel (%p520) target = $region60
        $region59: #{tpu_custom_call.1} parent=27 // pred_region
          %p523 = scmp.lt.s32.totalorder %s30, 1
          %s524 = scalar_select %p523, %s30, 1
          %s525 = scalar_lea.vmem %s8, %s524
        $region60: #{tpu_custom_call.1} parent=27 // pred_fallthru
          _
        // Predicated region
        $region61: #{tpu_custom_call.1} parent=27 // pred_check
          %p526 = pneg %p288
        $region62: #{tpu_custom_call.1} parent=27 // pred_check_branch
          %528 = sbr.rel (%p526) target = $region64
        $region63: #{tpu_custom_call.1} parent=27 // pred_region
          %p529 = scmp.lt.s32.totalorder %s30, 1
          %s530 = scalar_select %p529, %s30, 1
          %s531 = smul.addr %s530, 4
          %s532 = smul.addr %s531, 4
          %s533 = scalar_lea.vmem %s9, %s532
        $region64: #{tpu_custom_call.1} parent=27 // pred_fallthru
          _
        // Predicated region
        $region65: #{tpu_custom_call.1} parent=27 // pred_check
          %p534 = pneg %p314
        $region66: #{tpu_custom_call.1} parent=27 // pred_check_branch
          %536 = sbr.rel (%p534) target = $region68
        $region67: #{tpu_custom_call.1} parent=27 // pred_region
          %p537 = scmp.lt.s32.totalorder %s30, 1
          %s538 = scalar_select %p537, %s30, 1
          %s539 = scalar_lea.vmem %s10, %s538
        $region68: #{tpu_custom_call.1} parent=27 // pred_fallthru
          _
        // Predicated region
        $region69: #{tpu_custom_call.1} parent=27 // pred_check
          %p540 = pneg %p340
        $region70: #{tpu_custom_call.1} parent=27 // pred_check_branch
          %542 = sbr.rel (%p540) target = $region72
        $region71: #{tpu_custom_call.1} parent=27 // pred_region
          %p543 = scmp.lt.s32.totalorder %s30, 1
          %s544 = scalar_select %p543, %s30, 1
          %s545 = smul.addr %s544, 16
          %s546 = smul.addr %s545, 4
          %s547 = scalar_lea.vmem %s11, %s546
        $region72: #{tpu_custom_call.1} parent=27 // pred_fallthru
          _
        // Predicated region
        $region73: #{tpu_custom_call.1} parent=27 // pred_check
          %p548 = pneg %p366
        $region74: #{tpu_custom_call.1} parent=27 // pred_check_branch
          %550 = sbr.rel (%p548) target = $region76
        $region75: #{tpu_custom_call.1} parent=27 // pred_region
          %p551 = scmp.lt.s32.totalorder %s30, 1
          %s552 = scalar_select %p551, %s30, 1
          %s553 = scalar_lea.vmem %s12, %s552
        $region76: #{tpu_custom_call.1} parent=27 // pred_fallthru
          _
      $region28: #{tpu_custom_call.1} parent=5 // pred_fallthru
        _
      %p554 = scmp.le.s32.totalorder 1, %s22
      %p555 = scmp.lt.s32.totalorder %s22, 3
      %p556 = pnand %p554, %p555
      %p557 = pneg %p556
      // Predicated region
      $region77: #{tpu_custom_call.1} parent=5 // pred_check
        _
      $region78: #{tpu_custom_call.1} parent=5 // pred_check_branch
        %559 = sbr.rel (%p556) target = $region80
      $region79: #{tpu_custom_call.1} parent=5 // pred_region
        %s560 = ssub.s32 %s22, 1
        %s561 = smul.u32 2, %s31
        %p562 = scmp.lt.s32.totalorder %s561, 1
        %s563 = scalar_select %p562, %s561, 1
        %s564 = smul.addr %s563, 8
        %s565 = scalar_lea.vmem %s0, %s564
        %p566 = pneg %p60
        %p567 = pneg %p57
        %p568 = scmp.lt.s32.totalorder %s32, 1
        %s569 = scalar_select %p568, %s32, 1
        %s570 = scalar_lea.vmem %s1, %s569
        %p571 = pneg %p86
        %p572 = pneg %p83
        %p573 = scmp.lt.s32.totalorder %s32, 1
        %s574 = scalar_select %p573, %s32, 1
        %s575 = scalar_lea.vmem %s2, %s574
        %p576 = pneg %p112
        %p577 = pneg %p109
        %p578 = scmp.lt.s32.totalorder %s32, 1
        %s579 = scalar_select %p578, %s32, 1
        %s580 = smul.addr %s579, 4
        %s581 = smul.addr %s580, 4
        %s582 = scalar_lea.vmem %s3, %s581
        %p583 = pneg %p138
        %p584 = pneg %p135
        %p585 = scmp.lt.s32.totalorder %s32, 1
        %s586 = scalar_select %p585, %s32, 1
        %s587 = scalar_lea.vmem %s4, %s586
        %p588 = pneg %p164
        %p589 = pneg %p161
        %p590 = scmp.lt.s32.totalorder %s32, 1
        %s591 = scalar_select %p590, %s32, 1
        %s592 = smul.addr %s591, 4
        %s593 = smul.addr %s592, 4
        %s594 = scalar_lea.vmem %s5, %s593
        %p595 = pneg %p190
        %p596 = pneg %p187
        %p597 = scmp.lt.s32.totalorder %s32, 1
        %s598 = scalar_select %p597, %s32, 1
        %s599 = scalar_lea.vmem %s6, %s598
        %p600 = pneg %p216
        %p601 = pneg %p213
        %p602 = scmp.lt.s32.totalorder %s32, 1
        %s603 = scalar_select %p602, %s32, 1
        %s604 = scalar_lea.vmem %s7, %s603
        %p605 = pneg %p242
        %p606 = pneg %p239
        %p607 = scmp.lt.s32.totalorder %s32, 1
        %s608 = scalar_select %p607, %s32, 1
        %s609 = scalar_lea.vmem %s8, %s608
        %p610 = pneg %p268
        %p611 = pneg %p265
        %p612 = scmp.lt.s32.totalorder %s32, 1
        %s613 = scalar_select %p612, %s32, 1
        %s614 = smul.addr %s613, 4
        %s615 = smul.addr %s614, 4
        %s616 = scalar_lea.vmem %s9, %s615
        %p617 = pneg %p294
        %p618 = pneg %p291
        %p619 = scmp.lt.s32.totalorder %s32, 1
        %s620 = scalar_select %p619, %s32, 1
        %s621 = scalar_lea.vmem %s10, %s620
        %p622 = pneg %p320
        %p623 = pneg %p317
        %p624 = scmp.lt.s32.totalorder %s32, 1
        %s625 = scalar_select %p624, %s32, 1
        %s626 = smul.addr %s625, 16
        %s627 = smul.addr %s626, 4
        %s628 = scalar_lea.vmem %s11, %s627
        %p629 = pneg %p346
        %p630 = pneg %p343
        %p631 = scmp.lt.s32.totalorder %s32, 1
        %s632 = scalar_select %p631, %s32, 1
        %s633 = scalar_lea.vmem %s12, %s632
        %p634 = pneg %p372
        %p635 = pneg %p369
        %p636 = pneg %p393
        %p637 = pneg %p390
        %p638 = pneg %p414
        %p639 = pneg %p411
        %p640 = pneg %p440
        %p641 = pneg %p437
        %s642 = smul.u32 2, %s31
        %p643 = scmp.lt.s32.totalorder %s642, 1
        %s644 = scalar_select %p643, %s642, 1
        %s645 = smul.addr %s644, 8
        %s646 = scalar_lea.vmem %s0, %s645
        %s647 = smul.u32 2, %s31
        %p648 = scmp.lt.s32.totalorder %s32, 1
        %s649 = scalar_select %p648, %s32, 1
        %s650 = scalar_lea.vmem %s1, %s649
        %p651 = scmp.lt.s32.totalorder %s32, 1
        %s652 = scalar_select %p651, %s32, 1
        %s653 = scalar_lea.vmem %s2, %s652
        %p654 = scmp.lt.s32.totalorder %s32, 1
        %s655 = scalar_select %p654, %s32, 1
        %s656 = smul.addr %s655, 4
        %s657 = smul.addr %s656, 4
        %s658 = scalar_lea.vmem %s3, %s657
        %p659 = scmp.lt.s32.totalorder %s32, 1
        %s660 = scalar_select %p659, %s32, 1
        %s661 = scalar_lea.vmem %s4, %s660
        %p662 = scmp.lt.s32.totalorder %s32, 1
        %s663 = scalar_select %p662, %s32, 1
        %s664 = smul.addr %s663, 4
        %s665 = smul.addr %s664, 4
        %s666 = scalar_lea.vmem %s5, %s665
        %p667 = scmp.lt.s32.totalorder %s32, 1
        %s668 = scalar_select %p667, %s32, 1
        %s669 = scalar_lea.vmem %s6, %s668
        %p670 = scmp.lt.s32.totalorder %s32, 1
        %s671 = scalar_select %p670, %s32, 1
        %s672 = scalar_lea.vmem %s7, %s671
        %p673 = scmp.lt.s32.totalorder %s32, 1
        %s674 = scalar_select %p673, %s32, 1
        %s675 = scalar_lea.vmem %s8, %s674
        %p676 = scmp.lt.s32.totalorder %s32, 1
        %s677 = scalar_select %p676, %s32, 1
        %s678 = smul.addr %s677, 4
        %s679 = smul.addr %s678, 4
        %s680 = scalar_lea.vmem %s9, %s679
        %p681 = scmp.lt.s32.totalorder %s32, 1
        %s682 = scalar_select %p681, %s32, 1
        %s683 = scalar_lea.vmem %s10, %s682
        %p684 = scmp.lt.s32.totalorder %s32, 1
        %s685 = scalar_select %p684, %s32, 1
        %s686 = smul.addr %s685, 16
        %s687 = smul.addr %s686, 4
        %s688 = scalar_lea.vmem %s11, %s687
        %p689 = scmp.lt.s32.totalorder %s32, 1
        %s690 = scalar_select %p689, %s32, 1
        %s691 = scalar_lea.vmem %s12, %s690
        %s692 = smul.u32 2, %s31
        %p694 = scmp.eq.s32.totalorder %s32, 0
        // Predicated region
        $region81: #{tpu_custom_call.1} parent=79 // pred_check
          %p695 = pneg %p694
        $region82: #{tpu_custom_call.1} parent=79 // pred_check_branch
          %697 = sbr.rel (%p695) target = $region84
        $region83: #{tpu_custom_call.1} parent=79 // pred_region
          %v698 = vld [vmem:[%s646] sm:$0xff]
          %v699 = vld [vmem:[%s646 + $0x8] sm:$0xff]
          %vm700 = vcmask 261120
          %701 = vst.msk [vmem:[#allocation2] sm:$0xff] %vm700, %v698
          %702 = vst.msk [vmem:[#allocation2 + $0x8] sm:$0xff] %vm700, %v699
        $region84: #{tpu_custom_call.1} parent=79 // pred_fallthru
          _
        %v703 = vld [vmem:[#allocation2] sm:$0xff]
        %v704 = vld [vmem:[#allocation2 + $0x8] sm:$0xff]
        %v705 = vld [vmem:[%s650] sm:$0x1]
        %v706 = vld [vmem:[%s653] sm:$0x1]
        %vm707 = vcmask 261120
        %v708 = vsel %vm707, %v703, 0.0
        %709 = vadd.xlane.f32.xlu0 %v708
        %v710 = vpop.xlane.xlu0 %709
        %v711 = vsel %vm707, %v704, 0.0
        %712 = vadd.xlane.f32.xlu0 %v711
        %v713 = vpop.xlane.xlu0 %712
        %v714 = vrcp.pop 32.0
        %v715 = vmul.f32 32.0, %v714
        %v716 = vsub.f32 1.0, %v715
        %v717 = vmul.f32 %v714, %v716
        %v718 = vadd.f32 %v714, %v717
        %vm719 = vweird.f32 %v714
        %v720 = vsel %vm719, %v714, %v718
        %v721 = vmul.f32 %v710, %v720
        %v722 = vmul.f32 %v713, %v720
        %v723 = vsub.f32 %v703, %v721
        %v724 = vsub.f32 %v704, %v722
        %v725 = vmul.f32 %v723, %v723
        %v726 = vmul.f32 %v724, %v724
        %v727 = vsel %vm707, %v725, 0.0
        %728 = vadd.xlane.f32.xlu0 %v727
        %v729 = vpop.xlane.xlu0 %728
        %v730 = vsel %vm707, %v726, 0.0
        %731 = vadd.xlane.f32.xlu0 %v730
        %v732 = vpop.xlane.xlu0 %731
        %v733 = vmul.f32 %v729, %v720
        %v734 = vmul.f32 %v732, %v720
        %v735 = vadd.f32 %v733, 1e-05
        %v736 = vadd.f32 %v734, 1e-05
        %v737 = vrsqrt.pop %v735
        %v738 = vmul.f32 %v737, %v735
        %v739 = vmul.f32 %v738, %v737
        %v740 = vmul.f32 0.5, %v739
        %v741 = vsub.f32 1.5, %v740
        %v742 = vmul.f32 %v737, %v741
        %vm743 = vweird.f32 %v735
        %vm744 = vweird.f32 %v737
        %vm745 = vmor %vm743, %vm744
        %v746 = vsel %vm745, %v737, %v742
        %v747 = vrsqrt.pop %v736
        %v748 = vmul.f32 %v747, %v736
        %v749 = vmul.f32 %v748, %v747
        %v750 = vmul.f32 0.5, %v749
        %v751 = vsub.f32 1.5, %v750
        %v752 = vmul.f32 %v747, %v751
        %vm753 = vweird.f32 %v736
        %vm754 = vweird.f32 %v747
        %vm755 = vmor %vm753, %vm754
        %v756 = vsel %vm755, %v747, %v752
        %v757 = vmul.f32 %v723, %v746
        %v758 = vmul.f32 %v724, %v756
        %v760 = vperm.slane %v705, 0
        %v762 = vmul.f32 %v757, %v760
        %v763 = vmul.f32 %v758, %v760
        %v765 = vperm.slane %v706, 0
        %v767 = vadd.f32 %v762, %v765
        %v768 = vadd.f32 %v763, %v765
        %v769 = vpack.c.bf16 %v768, %v767
        %v770 = vld [vmem:[%s658] sm:$0xf]
        %v771 = vld [vmem:[%s658 + $0x4] sm:$0xf]
        %v772 = vld [vmem:[%s658 + $0x8] sm:$0xf]
        %v773 = vld [vmem:[%s658 + $0xc] sm:$0xf]
        %v774 = vld [vmem:[%s661] sm:$0x1]
        %v776 = vperm.slane %v774, 0
        %v782 = vunpack.c.l.b16 %v770
        %v783 = vunpack.c.l.b16 %v771
        %v784 = vunpack.c.l.b16 %v772
        %v785 = vunpack.c.l.b16 %v773
        %v786 = vpack.c.b16 %v783, %v782
        %v787 = vpack.c.b16 %v785, %v784
        %v791 = vsel %vm707, %v769, 0
        %793 = vmatpush.bf16.msra.mxu0 0
        %794 = vmatpush.bf16.msra.mxu0 0
        %795 = vmatpush.bf16.msra.mxu0 0
        %796 = vmatpush.bf16.msra.mxu0 0
        %797 = vmatpush.bf16.msra.mxu0 0
        %798 = vmatpush.bf16.msra.mxu0 0
        %799 = vmatpush.bf16.msra.mxu0 %v787
        %800 = vmatpush.bf16.msra.mxu0 %v786
        %801 = vmatmul.bf16.gmra.mxu0 %v791
        %v802 = vpop.f32.mrf.mxu0
        %v803 = vadd.f32 %v776, %v802
        %v804 = vpop.f32.mrf.mxu0
        %v805 = vadd.f32 %v776, %v804
        %806 = vdwg.mxu0
        %v807 = vlaneseq
        %v808 = vshrl.u32 %v807, 7
        %v809 = vlaneseq
        %v810 = vand.u32 %v809, 127
        %vm811 = vcmp.ge.s32.totalorder %v808, %v810
        %v812 = vld [vmem:[%s666] sm:$0xf]
        %v813 = vld [vmem:[%s666 + $0x4] sm:$0xf]
        %v814 = vld [vmem:[%s666 + $0x8] sm:$0xf]
        %v815 = vld [vmem:[%s666 + $0xc] sm:$0xf]
        %v816 = vpack.c.bf16 %v803, %v803
        %v817 = vpack.c.bf16 %v805, %v805
        %v819 = vunpack.c.l.b16 %v816
        %v820 = vpack.c.b16 %v819, %v819
        %821 = vrot.lane.b32.xlu0 %v820, 96
        %v822 = vpop.permute.xlu0 %821
        %vm823 = vcmask 64512
        %v825 = vsel %vm823, %v816, 0
        %v828 = vsel %vm823, %v822, 0
        %830 = vmatpush.bf16.xpose.msra.mxu0 0
        %831 = vmatpush.bf16.xpose.msra.mxu0 0
        %832 = vmatpush.bf16.xpose.msra.mxu0 0
        %833 = vmatpush.bf16.xpose.msra.mxu0 0
        %834 = vmatpush.bf16.xpose.msra.mxu0 0
        %835 = vmatpush.bf16.xpose.msra.mxu0 0
        %836 = vmatpush.bf16.xpose.msra.mxu0 0
        %837 = vmatpush.bf16.xpose.msra.mxu0 %v828
        %838 = vmatmul.bf16.gmra.mxu0 %v825
        %v839 = vpop.f32.mrf.mxu0
        %v840 = vadd.f32 0.0, %v839
        %v841 = vpop.f32.mrf.mxu0
        %842 = vdwg.mxu0
        %v844 = vunpack.c.l.b16 %v817
        %v845 = vpack.c.b16 %v844, %v844
        %846 = vrot.lane.b32.xlu0 %v845, 96
        %v847 = vpop.permute.xlu0 %846
        %v849 = vsel %vm823, %v817, 0
        %v852 = vsel %vm823, %v847, 0
        %854 = vmatpush.bf16.xpose.msra.mxu0 0
        %855 = vmatpush.bf16.xpose.msra.mxu0 0
        %856 = vmatpush.bf16.xpose.msra.mxu0 0
        %857 = vmatpush.bf16.xpose.msra.mxu0 0
        %858 = vmatpush.bf16.xpose.msra.mxu0 0
        %859 = vmatpush.bf16.xpose.msra.mxu0 0
        %860 = vmatpush.bf16.xpose.msra.mxu0 0
        %861 = vmatpush.bf16.xpose.msra.mxu0 %v852
        %862 = vmatmul.bf16.gmra.mxu0 %v849
        %v863 = vpop.f32.mrf.mxu0
        %v864 = vadd.f32 0.0, %v863
        %v865 = vpop.f32.mrf.mxu0
        %866 = vdwg.mxu0
        %v867 = vmul.f32 %v840, 0.35355338
        %v868 = vmul.f32 %v864, 0.35355338
        %v869 = vsel %vm811, 1, 0
        %vm870 = vcmp.eq.s32.totalorder %v869, 1
        %v871 = vsel %vm870, %v867, -1e+30
        %v872 = vsel %vm870, %v868, -1e+30
        %v873 = vsel %vm823, %v871, -inf
        %874 = vmax.xlane.f32.xlu0 %v873
        %v875 = vpop.xlane.xlu0 %874
        %v876 = vsel %vm823, %v872, -inf
        %877 = vmax.xlane.f32.xlu0 %v876
        %v878 = vpop.xlane.xlu0 %877
        %v879 = vsub.f32 %v871, %v875
        %v880 = vsub.f32 %v872, %v878
        %v881 = vmul.f32 %v879, 1.442695
        %v882 = vpow.pop %v881
        %v883 = vmul.f32 %v880, 1.442695
        %v884 = vpow.pop %v883
        %v885 = vsel %vm823, %v882, 0.0
        %886 = vadd.xlane.f32.xlu0 %v885
        %v887 = vpop.xlane.xlu0 %886
        %v888 = vsel %vm823, %v884, 0.0
        %889 = vadd.xlane.f32.xlu0 %v888
        %v890 = vpop.xlane.xlu0 %889
        %v891 = vrcp.pop %v887
        %v892 = vrcp.pop %v890
        %v893 = vmul.f32 %v882, %v891
        %v894 = vmul.f32 %v884, %v892
        %v895 = vpack.c.bf16 %v893, %v893
        %v896 = vpack.c.bf16 %v894, %v894
        %897 = vrot.lane.b32.xlu0 %v820, 64
        %v898 = vpop.permute.xlu0 %897
        %v900 = vsel %vm823, %v895, 0
        %vm902 = vcmask 1043456
        %v904 = vsel %vm902, %v898, 0
        %906 = vmatpush.bf16.msra.mxu0 0
        %907 = vmatpush.bf16.msra.mxu0 0
        %908 = vmatpush.bf16.msra.mxu0 0
        %909 = vmatpush.bf16.msra.mxu0 0
        %910 = vmatpush.bf16.msra.mxu0 0
        %911 = vmatpush.bf16.msra.mxu0 0
        %912 = vmatpush.bf16.msra.mxu0 0
        %913 = vmatpush.bf16.msra.mxu0 %v904
        %914 = vmatmul.bf16.gmra.mxu0 %v900
        %v915 = vpop.f32.mrf.mxu0
        %v916 = vadd.f32 0.0, %v915
        %v917 = vpop.f32.mrf.mxu0
        %918 = vdwg.mxu0
        %919 = vrot.lane.b32.xlu0 %v845, 64
        %v920 = vpop.permute.xlu0 %919
        %v922 = vsel %vm823, %v896, 0
        %v925 = vsel %vm902, %v920, 0
        %927 = vmatpush.bf16.msra.mxu0 0
        %928 = vmatpush.bf16.msra.mxu0 0
        %929 = vmatpush.bf16.msra.mxu0 0
        %930 = vmatpush.bf16.msra.mxu0 0
        %931 = vmatpush.bf16.msra.mxu0 0
        %932 = vmatpush.bf16.msra.mxu0 0
        %933 = vmatpush.bf16.msra.mxu0 0
        %934 = vmatpush.bf16.msra.mxu0 %v925
        %935 = vmatmul.bf16.gmra.mxu0 %v922
        %v936 = vpop.f32.mrf.mxu0
        %v937 = vadd.f32 0.0, %v936
        %v938 = vpop.f32.mrf.mxu0
        %939 = vdwg.mxu0
        %v940 = vpack.c.bf16 %v937, %v916
        %941 = vrot.lane.b32.xlu0 %v820, 120
        %v942 = vpop.permute.xlu0 %941
        %943 = vrot.lane.b32.xlu0 %v820, 88
        %v944 = vpop.permute.xlu0 %943
        %v946 = vsel %vm823, %v942, 0
        %v949 = vsel %vm823, %v944, 0
        %951 = vmatpush.bf16.xpose.msra.mxu0 0
        %952 = vmatpush.bf16.xpose.msra.mxu0 0
        %953 = vmatpush.bf16.xpose.msra.mxu0 0
        %954 = vmatpush.bf16.xpose.msra.mxu0 0
        %955 = vmatpush.bf16.xpose.msra.mxu0 0
        %956 = vmatpush.bf16.xpose.msra.mxu0 0
        %957 = vmatpush.bf16.xpose.msra.mxu0 0
        %958 = vmatpush.bf16.xpose.msra.mxu0 %v949
        %959 = vmatmul.bf16.gmra.mxu0 %v946
        %v960 = vpop.f32.mrf.mxu0
        %v961 = vadd.f32 0.0, %v960
        %v962 = vpop.f32.mrf.mxu0
        %963 = vdwg.mxu0
        %964 = vrot.lane.b32.xlu0 %v845, 120
        %v965 = vpop.permute.xlu0 %964
        %966 = vrot.lane.b32.xlu0 %v845, 88
        %v967 = vpop.permute.xlu0 %966
        %v969 = vsel %vm823, %v965, 0
        %v972 = vsel %vm823, %v967, 0
        %974 = vmatpush.bf16.xpose.msra.mxu0 0
        %975 = vmatpush.bf16.xpose.msra.mxu0 0
        %976 = vmatpush.bf16.xpose.msra.mxu0 0
        %977 = vmatpush.bf16.xpose.msra.mxu0 0
        %978 = vmatpush.bf16.xpose.msra.mxu0 0
        %979 = vmatpush.bf16.xpose.msra.mxu0 0
        %980 = vmatpush.bf16.xpose.msra.mxu0 0
        %981 = vmatpush.bf16.xpose.msra.mxu0 %v972
        %982 = vmatmul.bf16.gmra.mxu0 %v969
        %v983 = vpop.f32.mrf.mxu0
        %v984 = vadd.f32 0.0, %v983
        %v985 = vpop.f32.mrf.mxu0
        %986 = vdwg.mxu0
        %v987 = vmul.f32 %v961, 0.35355338
        %v988 = vmul.f32 %v984, 0.35355338
        %v989 = vsel %vm870, %v987, -1e+30
        %v990 = vsel %vm870, %v988, -1e+30
        %v991 = vsel %vm823, %v989, -inf
        %992 = vmax.xlane.f32.xlu0 %v991
        %v993 = vpop.xlane.xlu0 %992
        %v994 = vsel %vm823, %v990, -inf
        %995 = vmax.xlane.f32.xlu0 %v994
        %v996 = vpop.xlane.xlu0 %995
        %v997 = vsub.f32 %v989, %v993
        %v998 = vsub.f32 %v990, %v996
        %v999 = vmul.f32 %v997, 1.442695
        %v1000 = vpow.pop %v999
        %v1001 = vmul.f32 %v998, 1.442695
        %v1002 = vpow.pop %v1001
        %v1003 = vsel %vm823, %v1000, 0.0
        %1004 = vadd.xlane.f32.xlu0 %v1003
        %v1005 = vpop.xlane.xlu0 %1004
        %v1006 = vsel %vm823, %v1002, 0.0
        %1007 = vadd.xlane.f32.xlu0 %v1006
        %v1008 = vpop.xlane.xlu0 %1007
        %v1009 = vrcp.pop %v1005
        %v1010 = vrcp.pop %v1008
        %v1011 = vmul.f32 %v1000, %v1009
        %v1012 = vmul.f32 %v1002, %v1010
        %v1013 = vpack.c.bf16 %v1011, %v1011
        %v1014 = vpack.c.bf16 %v1012, %v1012
        %1015 = vrot.lane.b32.xlu0 %v820, 56
        %v1016 = vpop.permute.xlu0 %1015
        %v1018 = vsel %vm823, %v1013, 0
        %v1021 = vsel %vm902, %v1016, 0
        %1023 = vmatpush.bf16.msra.mxu0 0
        %1024 = vmatpush.bf16.msra.mxu0 0
        %1025 = vmatpush.bf16.msra.mxu0 0
        %1026 = vmatpush.bf16.msra.mxu0 0
        %1027 = vmatpush.bf16.msra.mxu0 0
        %1028 = vmatpush.bf16.msra.mxu0 0
        %1029 = vmatpush.bf16.msra.mxu0 0
        %1030 = vmatpush.bf16.msra.mxu0 %v1021
        %1031 = vmatmul.bf16.gmra.mxu0 %v1018
        %v1032 = vpop.f32.mrf.mxu0
        %v1033 = vadd.f32 0.0, %v1032
        %v1034 = vpop.f32.mrf.mxu0
        %1035 = vdwg.mxu0
        %1036 = vrot.lane.b32.xlu0 %v845, 56
        %v1037 = vpop.permute.xlu0 %1036
        %v1039 = vsel %vm823, %v1014, 0
        %v1042 = vsel %vm902, %v1037, 0
        %1044 = vmatpush.bf16.msra.mxu0 0
        %1045 = vmatpush.bf16.msra.mxu0 0
        %1046 = vmatpush.bf16.msra.mxu0 0
        %1047 = vmatpush.bf16.msra.mxu0 0
        %1048 = vmatpush.bf16.msra.mxu0 0
        %1049 = vmatpush.bf16.msra.mxu0 0
        %1050 = vmatpush.bf16.msra.mxu0 0
        %1051 = vmatpush.bf16.msra.mxu0 %v1042
        %1052 = vmatmul.bf16.gmra.mxu0 %v1039
        %v1053 = vpop.f32.mrf.mxu0
        %v1054 = vadd.f32 0.0, %v1053
        %v1055 = vpop.f32.mrf.mxu0
        %1056 = vdwg.mxu0
        %v1057 = vpack.c.bf16 %v1054, %v1033
        %v1059 = vsel %vm823, %v1057, 0
        %v1062 = vsel %vm902, %v813, 0
        %1064 = vmatpush.bf16.msra.mxu0 0
        %1065 = vmatpush.bf16.msra.mxu0 0
        %1066 = vmatpush.bf16.msra.mxu0 0
        %1067 = vmatpush.bf16.msra.mxu0 0
        %1068 = vmatpush.bf16.msra.mxu0 0
        %1069 = vmatpush.bf16.msra.mxu0 0
        %1070 = vmatpush.bf16.msra.mxu0 0
        %1071 = vmatpush.bf16.msra.mxu0 %v1062
        %1072 = vmatmul.bf16.gmra.mxu0 %v1059
        %v1073 = vpop.f32.mrf.mxu0
        %v1074 = vadd.f32 0.0, %v1073
        %v1075 = vpop.f32.mrf.mxu0
        %v1076 = vadd.f32 0.0, %v1075
        %1077 = vdwg.mxu0
        %v1079 = vsel %vm823, %v940, 0
        %v1082 = vsel %vm902, %v812, 0
        %1084 = vmatpush.bf16.msra.mxu0 0
        %1085 = vmatpush.bf16.msra.mxu0 0
        %1086 = vmatpush.bf16.msra.mxu0 0
        %1087 = vmatpush.bf16.msra.mxu0 0
        %1088 = vmatpush.bf16.msra.mxu0 0
        %1089 = vmatpush.bf16.msra.mxu0 0
        %1090 = vmatpush.bf16.msra.mxu0 0
        %1091 = vmatpush.bf16.msra.mxu0 %v1082
        %1092 = vmatmul.bf16.gmra.mxu0 %v1079
        %v1093 = vpop.f32.mrf.mxu0
        %v1094 = vadd.f32 %v1074, %v1093
        %v1095 = vpop.f32.mrf.mxu0
        %v1096 = vadd.f32 %v1076, %v1095
        %1097 = vdwg.mxu0
        %1098 = vrot.lane.b32.xlu0 %v820, 112
        %v1099 = vpop.permute.xlu0 %1098
        %1100 = vrot.lane.b32.xlu0 %v820, 80
        %v1101 = vpop.permute.xlu0 %1100
        %v1103 = vsel %vm823, %v1099, 0
        %v1106 = vsel %vm823, %v1101, 0
        %1108 = vmatpush.bf16.xpose.msra.mxu0 0
        %1109 = vmatpush.bf16.xpose.msra.mxu0 0
        %1110 = vmatpush.bf16.xpose.msra.mxu0 0
        %1111 = vmatpush.bf16.xpose.msra.mxu0 0
        %1112 = vmatpush.bf16.xpose.msra.mxu0 0
        %1113 = vmatpush.bf16.xpose.msra.mxu0 0
        %1114 = vmatpush.bf16.xpose.msra.mxu0 0
        %1115 = vmatpush.bf16.xpose.msra.mxu0 %v1106
        %1116 = vmatmul.bf16.gmra.mxu0 %v1103
        %v1117 = vpop.f32.mrf.mxu0
        %v1118 = vadd.f32 0.0, %v1117
        %v1119 = vpop.f32.mrf.mxu0
        %1120 = vdwg.mxu0
        %1121 = vrot.lane.b32.xlu0 %v845, 112
        %v1122 = vpop.permute.xlu0 %1121
        %1123 = vrot.lane.b32.xlu0 %v845, 80
        %v1124 = vpop.permute.xlu0 %1123
        %v1126 = vsel %vm823, %v1122, 0
        %v1129 = vsel %vm823, %v1124, 0
        %1131 = vmatpush.bf16.xpose.msra.mxu0 0
        %1132 = vmatpush.bf16.xpose.msra.mxu0 0
        %1133 = vmatpush.bf16.xpose.msra.mxu0 0
        %1134 = vmatpush.bf16.xpose.msra.mxu0 0
        %1135 = vmatpush.bf16.xpose.msra.mxu0 0
        %1136 = vmatpush.bf16.xpose.msra.mxu0 0
        %1137 = vmatpush.bf16.xpose.msra.mxu0 0
        %1138 = vmatpush.bf16.xpose.msra.mxu0 %v1129
        %1139 = vmatmul.bf16.gmra.mxu0 %v1126
        %v1140 = vpop.f32.mrf.mxu0
        %v1141 = vadd.f32 0.0, %v1140
        %v1142 = vpop.f32.mrf.mxu0
        %1143 = vdwg.mxu0
        %v1144 = vmul.f32 %v1118, 0.35355338
        %v1145 = vmul.f32 %v1141, 0.35355338
        %v1146 = vsel %vm870, %v1144, -1e+30
        %v1147 = vsel %vm870, %v1145, -1e+30
        %v1148 = vsel %vm823, %v1146, -inf
        %1149 = vmax.xlane.f32.xlu0 %v1148
        %v1150 = vpop.xlane.xlu0 %1149
        %v1151 = vsel %vm823, %v1147, -inf
        %1152 = vmax.xlane.f32.xlu0 %v1151
        %v1153 = vpop.xlane.xlu0 %1152
        %v1154 = vsub.f32 %v1146, %v1150
        %v1155 = vsub.f32 %v1147, %v1153
        %v1156 = vmul.f32 %v1154, 1.442695
        %v1157 = vpow.pop %v1156
        %v1158 = vmul.f32 %v1155, 1.442695
        %v1159 = vpow.pop %v1158
        %v1160 = vsel %vm823, %v1157, 0.0
        %1161 = vadd.xlane.f32.xlu0 %v1160
        %v1162 = vpop.xlane.xlu0 %1161
        %v1163 = vsel %vm823, %v1159, 0.0
        %1164 = vadd.xlane.f32.xlu0 %v1163
        %v1165 = vpop.xlane.xlu0 %1164
        %v1166 = vrcp.pop %v1162
        %v1167 = vrcp.pop %v1165
        %v1168 = vmul.f32 %v1157, %v1166
        %v1169 = vmul.f32 %v1159, %v1167
        %v1170 = vpack.c.bf16 %v1168, %v1168
        %v1171 = vpack.c.bf16 %v1169, %v1169
        %1172 = vrot.lane.b32.xlu0 %v820, 48
        %v1173 = vpop.permute.xlu0 %1172
        %v1175 = vsel %vm823, %v1170, 0
        %v1178 = vsel %vm902, %v1173, 0
        %1180 = vmatpush.bf16.msra.mxu0 0
        %1181 = vmatpush.bf16.msra.mxu0 0
        %1182 = vmatpush.bf16.msra.mxu0 0
        %1183 = vmatpush.bf16.msra.mxu0 0
        %1184 = vmatpush.bf16.msra.mxu0 0
        %1185 = vmatpush.bf16.msra.mxu0 0
        %1186 = vmatpush.bf16.msra.mxu0 0
        %1187 = vmatpush.bf16.msra.mxu0 %v1178
        %1188 = vmatmul.bf16.gmra.mxu0 %v1175
        %v1189 = vpop.f32.mrf.mxu0
        %v1190 = vadd.f32 0.0, %v1189
        %v1191 = vpop.f32.mrf.mxu0
        %1192 = vdwg.mxu0
        %1193 = vrot.lane.b32.xlu0 %v845, 48
        %v1194 = vpop.permute.xlu0 %1193
        %v1196 = vsel %vm823, %v1171, 0
        %v1199 = vsel %vm902, %v1194, 0
        %1201 = vmatpush.bf16.msra.mxu0 0
        %1202 = vmatpush.bf16.msra.mxu0 0
        %1203 = vmatpush.bf16.msra.mxu0 0
        %1204 = vmatpush.bf16.msra.mxu0 0
        %1205 = vmatpush.bf16.msra.mxu0 0
        %1206 = vmatpush.bf16.msra.mxu0 0
        %1207 = vmatpush.bf16.msra.mxu0 0
        %1208 = vmatpush.bf16.msra.mxu0 %v1199
        %1209 = vmatmul.bf16.gmra.mxu0 %v1196
        %v1210 = vpop.f32.mrf.mxu0
        %v1211 = vadd.f32 0.0, %v1210
        %v1212 = vpop.f32.mrf.mxu0
        %1213 = vdwg.mxu0
        %v1214 = vpack.c.bf16 %v1211, %v1190
        %v1216 = vsel %vm823, %v1214, 0
        %v1219 = vsel %vm902, %v814, 0
        %1221 = vmatpush.bf16.msra.mxu0 0
        %1222 = vmatpush.bf16.msra.mxu0 0
        %1223 = vmatpush.bf16.msra.mxu0 0
        %1224 = vmatpush.bf16.msra.mxu0 0
        %1225 = vmatpush.bf16.msra.mxu0 0
        %1226 = vmatpush.bf16.msra.mxu0 0
        %1227 = vmatpush.bf16.msra.mxu0 0
        %1228 = vmatpush.bf16.msra.mxu0 %v1219
        %1229 = vmatmul.bf16.gmra.mxu0 %v1216
        %v1230 = vpop.f32.mrf.mxu0
        %v1231 = vadd.f32 0.0, %v1230
        %v1232 = vpop.f32.mrf.mxu0
        %v1233 = vadd.f32 0.0, %v1232
        %1234 = vdwg.mxu0
        %v1235 = vadd.f32 %v1094, %v1231
        %v1236 = vadd.f32 %v1096, %v1233
        %1237 = vrot.lane.b32.xlu0 %v820, 104
        %v1238 = vpop.permute.xlu0 %1237
        %1239 = vrot.lane.b32.xlu0 %v820, 72
        %v1240 = vpop.permute.xlu0 %1239
        %v1242 = vsel %vm823, %v1238, 0
        %v1245 = vsel %vm823, %v1240, 0
        %1247 = vmatpush.bf16.xpose.msra.mxu0 0
        %1248 = vmatpush.bf16.xpose.msra.mxu0 0
        %1249 = vmatpush.bf16.xpose.msra.mxu0 0
        %1250 = vmatpush.bf16.xpose.msra.mxu0 0
        %1251 = vmatpush.bf16.xpose.msra.mxu0 0
        %1252 = vmatpush.bf16.xpose.msra.mxu0 0
        %1253 = vmatpush.bf16.xpose.msra.mxu0 0
        %1254 = vmatpush.bf16.xpose.msra.mxu0 %v1245
        %1255 = vmatmul.bf16.gmra.mxu0 %v1242
        %v1256 = vpop.f32.mrf.mxu0
        %v1257 = vadd.f32 0.0, %v1256
        %v1258 = vpop.f32.mrf.mxu0
        %1259 = vdwg.mxu0
        %1260 = vrot.lane.b32.xlu0 %v845, 104
        %v1261 = vpop.permute.xlu0 %1260
        %1262 = vrot.lane.b32.xlu0 %v845, 72
        %v1263 = vpop.permute.xlu0 %1262
        %v1265 = vsel %vm823, %v1261, 0
        %v1268 = vsel %vm823, %v1263, 0
        %1270 = vmatpush.bf16.xpose.msra.mxu0 0
        %1271 = vmatpush.bf16.xpose.msra.mxu0 0
        %1272 = vmatpush.bf16.xpose.msra.mxu0 0
        %1273 = vmatpush.bf16.xpose.msra.mxu0 0
        %1274 = vmatpush.bf16.xpose.msra.mxu0 0
        %1275 = vmatpush.bf16.xpose.msra.mxu0 0
        %1276 = vmatpush.bf16.xpose.msra.mxu0 0
        %1277 = vmatpush.bf16.xpose.msra.mxu0 %v1268
        %1278 = vmatmul.bf16.gmra.mxu0 %v1265
        %v1279 = vpop.f32.mrf.mxu0
        %v1280 = vadd.f32 0.0, %v1279
        %v1281 = vpop.f32.mrf.mxu0
        %1282 = vdwg.mxu0
        %v1283 = vmul.f32 %v1257, 0.35355338
        %v1284 = vmul.f32 %v1280, 0.35355338
        %v1285 = vsel %vm870, %v1283, -1e+30
        %v1286 = vsel %vm870, %v1284, -1e+30
        %v1287 = vsel %vm823, %v1285, -inf
        %1288 = vmax.xlane.f32.xlu0 %v1287
        %v1289 = vpop.xlane.xlu0 %1288
        %v1290 = vsel %vm823, %v1286, -inf
        %1291 = vmax.xlane.f32.xlu0 %v1290
        %v1292 = vpop.xlane.xlu0 %1291
        %v1293 = vsub.f32 %v1285, %v1289
        %v1294 = vsub.f32 %v1286, %v1292
        %v1295 = vmul.f32 %v1293, 1.442695
        %v1296 = vpow.pop %v1295
        %v1297 = vmul.f32 %v1294, 1.442695
        %v1298 = vpow.pop %v1297
        %v1299 = vsel %vm823, %v1296, 0.0
        %1300 = vadd.xlane.f32.xlu0 %v1299
        %v1301 = vpop.xlane.xlu0 %1300
        %v1302 = vsel %vm823, %v1298, 0.0
        %1303 = vadd.xlane.f32.xlu0 %v1302
        %v1304 = vpop.xlane.xlu0 %1303
        %v1305 = vrcp.pop %v1301
        %v1306 = vrcp.pop %v1304
        %v1307 = vmul.f32 %v1296, %v1305
        %v1308 = vmul.f32 %v1298, %v1306
        %v1309 = vpack.c.bf16 %v1307, %v1307
        %v1310 = vpack.c.bf16 %v1308, %v1308
        %1311 = vrot.lane.b32.xlu0 %v820, 40
        %v1312 = vpop.permute.xlu0 %1311
        %v1314 = vsel %vm823, %v1309, 0
        %v1317 = vsel %vm902, %v1312, 0
        %1319 = vmatpush.bf16.msra.mxu0 0
        %1320 = vmatpush.bf16.msra.mxu0 0
        %1321 = vmatpush.bf16.msra.mxu0 0
        %1322 = vmatpush.bf16.msra.mxu0 0
        %1323 = vmatpush.bf16.msra.mxu0 0
        %1324 = vmatpush.bf16.msra.mxu0 0
        %1325 = vmatpush.bf16.msra.mxu0 0
        %1326 = vmatpush.bf16.msra.mxu0 %v1317
        %1327 = vmatmul.bf16.gmra.mxu0 %v1314
        %v1328 = vpop.f32.mrf.mxu0
        %v1329 = vadd.f32 0.0, %v1328
        %v1330 = vpop.f32.mrf.mxu0
        %1331 = vdwg.mxu0
        %1332 = vrot.lane.b32.xlu0 %v845, 40
        %v1333 = vpop.permute.xlu0 %1332
        %v1335 = vsel %vm823, %v1310, 0
        %v1338 = vsel %vm902, %v1333, 0
        %1340 = vmatpush.bf16.msra.mxu0 0
        %1341 = vmatpush.bf16.msra.mxu0 0
        %1342 = vmatpush.bf16.msra.mxu0 0
        %1343 = vmatpush.bf16.msra.mxu0 0
        %1344 = vmatpush.bf16.msra.mxu0 0
        %1345 = vmatpush.bf16.msra.mxu0 0
        %1346 = vmatpush.bf16.msra.mxu0 0
        %1347 = vmatpush.bf16.msra.mxu0 %v1338
        %1348 = vmatmul.bf16.gmra.mxu0 %v1335
        %v1349 = vpop.f32.mrf.mxu0
        %v1350 = vadd.f32 0.0, %v1349
        %v1351 = vpop.f32.mrf.mxu0
        %1352 = vdwg.mxu0
        %v1353 = vpack.c.bf16 %v1350, %v1329
        %v1355 = vsel %vm823, %v1353, 0
        %v1358 = vsel %vm902, %v815, 0
        %1360 = vmatpush.bf16.msra.mxu0 0
        %1361 = vmatpush.bf16.msra.mxu0 0
        %1362 = vmatpush.bf16.msra.mxu0 0
        %1363 = vmatpush.bf16.msra.mxu0 0
        %1364 = vmatpush.bf16.msra.mxu0 0
        %1365 = vmatpush.bf16.msra.mxu0 0
        %1366 = vmatpush.bf16.msra.mxu0 0
        %1367 = vmatpush.bf16.msra.mxu0 %v1358
        %1368 = vmatmul.bf16.gmra.mxu0 %v1355
        %v1369 = vpop.f32.mrf.mxu0
        %v1370 = vadd.f32 0.0, %v1369
        %v1371 = vpop.f32.mrf.mxu0
        %v1372 = vadd.f32 0.0, %v1371
        %1373 = vdwg.mxu0
        %v1374 = vadd.f32 %v1235, %v1370
        %v1375 = vadd.f32 %v1236, %v1372
        %v1376 = vadd.f32 %v703, %v1374
        %v1377 = vadd.f32 %v704, %v1375
        %v1378 = vld [vmem:[%s669] sm:$0x1]
        %v1380 = vperm.slane %v1378, 0
        %v1382 = vadd.f32 %v1376, %v1380
        %v1383 = vadd.f32 %v1377, %v1380
        %v1384 = vld [vmem:[%s672] sm:$0x1]
        %v1385 = vld [vmem:[%s675] sm:$0x1]
        %v1386 = vsel %vm707, %v1382, 0.0
        %1387 = vadd.xlane.f32.xlu0 %v1386
        %v1388 = vpop.xlane.xlu0 %1387
        %v1389 = vsel %vm707, %v1383, 0.0
        %1390 = vadd.xlane.f32.xlu0 %v1389
        %v1391 = vpop.xlane.xlu0 %1390
        %v1392 = vmul.f32 %v1388, %v720
        %v1393 = vmul.f32 %v1391, %v720
        %v1394 = vsub.f32 %v1382, %v1392
        %v1395 = vsub.f32 %v1383, %v1393
        %v1396 = vmul.f32 %v1394, %v1394
        %v1397 = vmul.f32 %v1395, %v1395
        %v1398 = vsel %vm707, %v1396, 0.0
        %1399 = vadd.xlane.f32.xlu0 %v1398
        %v1400 = vpop.xlane.xlu0 %1399
        %v1401 = vsel %vm707, %v1397, 0.0
        %1402 = vadd.xlane.f32.xlu0 %v1401
        %v1403 = vpop.xlane.xlu0 %1402
        %v1404 = vmul.f32 %v1400, %v720
        %v1405 = vmul.f32 %v1403, %v720
        %v1406 = vadd.f32 %v1404, 1e-05
        %v1407 = vadd.f32 %v1405, 1e-05
        %v1408 = vrsqrt.pop %v1406
        %v1409 = vmul.f32 %v1408, %v1406
        %v1410 = vmul.f32 %v1409, %v1408
        %v1411 = vmul.f32 0.5, %v1410
        %v1412 = vsub.f32 1.5, %v1411
        %v1413 = vmul.f32 %v1408, %v1412
        %vm1414 = vweird.f32 %v1406
        %vm1415 = vweird.f32 %v1408
        %vm1416 = vmor %vm1414, %vm1415
        %v1417 = vsel %vm1416, %v1408, %v1413
        %v1418 = vrsqrt.pop %v1407
        %v1419 = vmul.f32 %v1418, %v1407
        %v1420 = vmul.f32 %v1419, %v1418
        %v1421 = vmul.f32 0.5, %v1420
        %v1422 = vsub.f32 1.5, %v1421
        %v1423 = vmul.f32 %v1418, %v1422
        %vm1424 = vweird.f32 %v1407
        %vm1425 = vweird.f32 %v1418
        %vm1426 = vmor %vm1424, %vm1425
        %v1427 = vsel %vm1426, %v1418, %v1423
        %v1428 = vmul.f32 %v1394, %v1417
        %v1429 = vmul.f32 %v1395, %v1427
        %v1431 = vperm.slane %v1384, 0
        %v1433 = vmul.f32 %v1428, %v1431
        %v1434 = vmul.f32 %v1429, %v1431
        %v1436 = vperm.slane %v1385, 0
        %v1438 = vadd.f32 %v1433, %v1436
        %v1439 = vadd.f32 %v1434, %v1436
        %v1440 = vpack.c.bf16 %v1439, %v1438
        %v1441 = vld [vmem:[%s680] sm:$0xf]
        %v1442 = vld [vmem:[%s680 + $0x4] sm:$0xf]
        %v1443 = vld [vmem:[%s680 + $0x8] sm:$0xf]
        %v1444 = vld [vmem:[%s680 + $0xc] sm:$0xf]
        %v1445 = vld [vmem:[%s683] sm:$0x1]
        %v1447 = vperm.slane %v1445, 0
        %v1453 = vunpack.c.l.b16 %v1441
        %v1454 = vunpack.c.l.b16 %v1442
        %v1455 = vunpack.c.l.b16 %v1443
        %v1456 = vunpack.c.l.b16 %v1444
        %v1457 = vpack.c.b16 %v1454, %v1453
        %v1458 = vpack.c.b16 %v1456, %v1455
        %v1462 = vsel %vm707, %v1440, 0
        %1464 = vmatpush.bf16.msra.mxu0 0
        %1465 = vmatpush.bf16.msra.mxu0 0
        %1466 = vmatpush.bf16.msra.mxu0 0
        %1467 = vmatpush.bf16.msra.mxu0 0
        %1468 = vmatpush.bf16.msra.mxu0 0
        %1469 = vmatpush.bf16.msra.mxu0 0
        %1470 = vmatpush.bf16.msra.mxu0 %v1458
        %1471 = vmatpush.bf16.msra.mxu0 %v1457
        %1472 = vmatmul.bf16.gmra.mxu0 %v1462
        %v1473 = vpop.f32.mrf.mxu0
        %v1474 = vadd.f32 %v1447, %v1473
        %v1475 = vpop.f32.mrf.mxu0
        %v1476 = vadd.f32 %v1447, %v1475
        %1477 = vdwg.mxu0
        %v1478 = vmul.f32 %v1474, 0.5
        %v1479 = vmul.f32 %v1476, 0.5
        %v1480 = vmul.f32 %v1474, 0.70710677
        %v1481 = vmul.f32 %v1476, 0.70710677
        %v1482 = vmul.f32 %v1480, %v1480
        %v1483 = vmin.f32 16.0, %v1482
        %v1484 = vmul.f32 %v1483, 2.1237322e-06
        %v1485 = vadd.f32 %v1484, 0.00028619796
        %v1486 = vmul.f32 %v1483, %v1485
        %v1487 = vadd.f32 %v1486, 0.0036580483
        %v1488 = vmul.f32 %v1483, %v1487
        %v1489 = vadd.f32 %v1488, 0.05243302
        %v1490 = vmul.f32 %v1483, %v1489
        %v1491 = vadd.f32 %v1490, 0.18741608
        %v1492 = vmul.f32 %v1483, %v1491
        %v1493 = vadd.f32 %v1492, 1.1283791
        %v1494 = vmul.f32 %v1480, %v1493
        %v1495 = vmul.f32 %v1483, 3.8918573e-05
        %v1496 = vadd.f32 %v1495, 0.001143296
        %v1497 = vmul.f32 %v1483, %v1496
        %v1498 = vadd.f32 %v1497, 0.014752088
        %v1499 = vmul.f32 %v1483, %v1498
        %v1500 = vadd.f32 %v1499, 0.112945676
        %v1501 = vmul.f32 %v1483, %v1500
        %v1502 = vadd.f32 %v1501, 0.4994258
        %v1503 = vmul.f32 %v1483, %v1502
        %v1504 = vadd.f32 %v1503, 1.0
        %v1505 = vrcp.pop %v1504
        %v1506 = vmul.f32 %v1504, %v1505
        %v1507 = vsub.f32 1.0, %v1506
        %v1508 = vmul.f32 %v1505, %v1507
        %v1509 = vadd.f32 %v1505, %v1508
        %vm1510 = vweird.f32 %v1504
        %vm1511 = vweird.f32 %v1505
        %vm1512 = vmor %vm1510, %vm1511
        %v1513 = vsel %vm1512, %v1505, %v1509
        %v1514 = vand.u32 2147483647, %v1504
        %vm1515 = vcmp.eq.f32.partialorder %v1514, 8.507059e+37
        %v1516 = vand.u32 %v1504, 2147483648
        %v1517 = vor.u32 1.1754944e-38, %v1516
        %v1518 = vsel %vm1515, %v1517, %v1513
        %v1519 = vmul.f32 %v1494, %v1518
        %v1520 = vmin.f32 %v1519, 1.0
        %v1521 = vmax.f32 %v1520, -1.0
        %v1522 = vmul.f32 %v1481, %v1481
        %v1523 = vmin.f32 16.0, %v1522
        %v1524 = vmul.f32 %v1523, 2.1237322e-06
        %v1525 = vadd.f32 %v1524, 0.00028619796
        %v1526 = vmul.f32 %v1523, %v1525
        %v1527 = vadd.f32 %v1526, 0.0036580483
        %v1528 = vmul.f32 %v1523, %v1527
        %v1529 = vadd.f32 %v1528, 0.05243302
        %v1530 = vmul.f32 %v1523, %v1529
        %v1531 = vadd.f32 %v1530, 0.18741608
        %v1532 = vmul.f32 %v1523, %v1531
        %v1533 = vadd.f32 %v1532, 1.1283791
        %v1534 = vmul.f32 %v1481, %v1533
        %v1535 = vmul.f32 %v1523, 3.8918573e-05
        %v1536 = vadd.f32 %v1535, 0.001143296
        %v1537 = vmul.f32 %v1523, %v1536
        %v1538 = vadd.f32 %v1537, 0.014752088
        %v1539 = vmul.f32 %v1523, %v1538
        %v1540 = vadd.f32 %v1539, 0.112945676
        %v1541 = vmul.f32 %v1523, %v1540
        %v1542 = vadd.f32 %v1541, 0.4994258
        %v1543 = vmul.f32 %v1523, %v1542
        %v1544 = vadd.f32 %v1543, 1.0
        %v1545 = vrcp.pop %v1544
        %v1546 = vmul.f32 %v1544, %v1545
        %v1547 = vsub.f32 1.0, %v1546
        %v1548 = vmul.f32 %v1545, %v1547
        %v1549 = vadd.f32 %v1545, %v1548
        %vm1550 = vweird.f32 %v1544
        %vm1551 = vweird.f32 %v1545
        %vm1552 = vmor %vm1550, %vm1551
        %v1553 = vsel %vm1552, %v1545, %v1549
        %v1554 = vand.u32 2147483647, %v1544
        %vm1555 = vcmp.eq.f32.partialorder %v1554, 8.507059e+37
        %v1556 = vand.u32 %v1544, 2147483648
        %v1557 = vor.u32 1.1754944e-38, %v1556
        %v1558 = vsel %vm1555, %v1557, %v1553
        %v1559 = vmul.f32 %v1534, %v1558
        %v1560 = vmin.f32 %v1559, 1.0
        %v1561 = vmax.f32 %v1560, -1.0
        %v1562 = vadd.f32 %v1521, 1.0
        %v1563 = vadd.f32 %v1561, 1.0
        %v1564 = vmul.f32 %v1478, %v1562
        %v1565 = vmul.f32 %v1479, %v1563
        %v1566 = vpack.c.bf16 %v1565, %v1564
        %v1567 = vld [vmem:[%s688] sm:$0xf]
        %v1568 = vld [vmem:[%s688 + $0x4] sm:$0xf]
        %v1569 = vld [vmem:[%s688 + $0x8] sm:$0xf]
        %v1570 = vld [vmem:[%s688 + $0xc] sm:$0xf]
        %v1571 = vld [vmem:[%s688 + $0x10] sm:$0xf]
        %v1572 = vld [vmem:[%s688 + $0x14] sm:$0xf]
        %v1573 = vld [vmem:[%s688 + $0x18] sm:$0xf]
        %v1574 = vld [vmem:[%s688 + $0x1c] sm:$0xf]
        %v1575 = vld [vmem:[%s688 + $0x20] sm:$0xf]
        %v1576 = vld [vmem:[%s688 + $0x24] sm:$0xf]
        %v1577 = vld [vmem:[%s688 + $0x28] sm:$0xf]
        %v1578 = vld [vmem:[%s688 + $0x2c] sm:$0xf]
        %v1579 = vld [vmem:[%s688 + $0x30] sm:$0xf]
        %v1580 = vld [vmem:[%s688 + $0x34] sm:$0xf]
        %v1581 = vld [vmem:[%s688 + $0x38] sm:$0xf]
        %v1582 = vld [vmem:[%s688 + $0x3c] sm:$0xf]
        %v1583 = vld [vmem:[%s691] sm:$0x1]
        %v1585 = vperm.slane %v1583, 0
        %v1603 = vunpack.c.l.b16 %v1567
        %v1604 = vunpack.c.l.b16 %v1568
        %v1605 = vunpack.c.l.b16 %v1569
        %v1606 = vunpack.c.l.b16 %v1570
        %v1607 = vunpack.c.l.b16 %v1571
        %v1608 = vunpack.c.l.b16 %v1572
        %v1609 = vunpack.c.l.b16 %v1573
        %v1610 = vunpack.c.l.b16 %v1574
        %v1611 = vunpack.c.l.b16 %v1575
        %v1612 = vunpack.c.l.b16 %v1576
        %v1613 = vunpack.c.l.b16 %v1577
        %v1614 = vunpack.c.l.b16 %v1578
        %v1615 = vunpack.c.l.b16 %v1579
        %v1616 = vunpack.c.l.b16 %v1580
        %v1617 = vunpack.c.l.b16 %v1581
        %v1618 = vunpack.c.l.b16 %v1582
        %v1619 = vpack.c.b16 %v1604, %v1603
        %v1620 = vpack.c.b16 %v1606, %v1605
        %v1621 = vpack.c.b16 %v1608, %v1607
        %v1622 = vpack.c.b16 %v1610, %v1609
        %v1623 = vpack.c.b16 %v1612, %v1611
        %v1624 = vpack.c.b16 %v1614, %v1613
        %v1625 = vpack.c.b16 %v1616, %v1615
        %v1626 = vpack.c.b16 %v1618, %v1617
        %1635 = vmatpush.bf16.msra.mxu0 %v1626
        %1636 = vmatpush.bf16.msra.mxu0 %v1625
        %1637 = vmatpush.bf16.msra.mxu0 %v1624
        %1638 = vmatpush.bf16.msra.mxu0 %v1623
        %1639 = vmatpush.bf16.msra.mxu0 %v1622
        %1640 = vmatpush.bf16.msra.mxu0 %v1621
        %1641 = vmatpush.bf16.msra.mxu0 %v1620
        %1642 = vmatpush.bf16.msra.mxu0 %v1619
        %1643 = vmatmul.bf16.gmra.mxu0 %v1566
        %v1644 = vpop.f32.mrf.mxu0
        %v1645 = vadd.f32 %v1585, %v1644
        %v1646 = vpop.f32.mrf.mxu0
        %v1647 = vadd.f32 %v1585, %v1646
        %1648 = vdwg.mxu0
        %v1649 = vadd.f32 %v1382, %v1645
        %v1650 = vadd.f32 %v1383, %v1647
        %1651 = vst.msk [vmem:[#allocation2] sm:$0xff] %vm707, %v1649
        %1652 = vst.msk [vmem:[#allocation2 + $0x8] sm:$0xff] %vm707, %v1650
        %p1653 = scmp.eq.s32.totalorder %s32, 1
        // Predicated region
        $region85: #{tpu_custom_call.1} parent=79 // pred_check
          %p1654 = pneg %p1653
        $region86: #{tpu_custom_call.1} parent=79 // pred_check_branch
          %1656 = sbr.rel (%p1654) target = $region88
        $region87: #{tpu_custom_call.1} parent=79 // pred_region
          %v1657 = vld [vmem:[%s13] sm:$0x1]
          %v1658 = vld [vmem:[%s14] sm:$0x1]
          %vm1659 = vcmask 261127
          %v1660 = vsel %vm1659, %v1649, 0.0
          %1661 = vadd.xlane.f32.xlu0 %v1660
          %v1662 = vpop.xlane.xlu0 %1661
          %v1663 = vsel %vm1659, %v1650, 0.0
          %1664 = vadd.xlane.f32.xlu0 %v1663
          %v1665 = vpop.xlane.xlu0 %1664
          %v1666 = vmul.f32 %v1662, %v720
          %v1667 = vmul.f32 %v1665, %v720
          %v1668 = vsub.f32 %v1649, %v1666
          %v1669 = vsub.f32 %v1650, %v1667
          %v1670 = vmul.f32 %v1668, %v1668
          %v1671 = vmul.f32 %v1669, %v1669
          %v1672 = vsel %vm1659, %v1670, 0.0
          %1673 = vadd.xlane.f32.xlu0 %v1672
          %v1674 = vpop.xlane.xlu0 %1673
          %v1675 = vsel %vm1659, %v1671, 0.0
          %1676 = vadd.xlane.f32.xlu0 %v1675
          %v1677 = vpop.xlane.xlu0 %1676
          %v1678 = vmul.f32 %v1674, %v720
          %v1679 = vmul.f32 %v1677, %v720
          %v1680 = vadd.f32 %v1678, 1e-05
          %v1681 = vadd.f32 %v1679, 1e-05
          %v1682 = vrsqrt.pop %v1680
          %v1683 = vmul.f32 %v1682, %v1680
          %v1684 = vmul.f32 %v1683, %v1682
          %v1685 = vmul.f32 0.5, %v1684
          %v1686 = vsub.f32 1.5, %v1685
          %v1687 = vmul.f32 %v1682, %v1686
          %vm1688 = vweird.f32 %v1680
          %vm1689 = vweird.f32 %v1682
          %vm1690 = vmor %vm1688, %vm1689
          %v1691 = vsel %vm1690, %v1682, %v1687
          %v1692 = vrsqrt.pop %v1681
          %v1693 = vmul.f32 %v1692, %v1681
          %v1694 = vmul.f32 %v1693, %v1692
          %v1695 = vmul.f32 0.5, %v1694
          %v1696 = vsub.f32 1.5, %v1695
          %v1697 = vmul.f32 %v1692, %v1696
          %vm1698 = vweird.f32 %v1681
          %vm1699 = vweird.f32 %v1692
          %vm1700 = vmor %vm1698, %vm1699
          %v1701 = vsel %vm1700, %v1692, %v1697
          %v1702 = vmul.f32 %v1668, %v1691
          %v1703 = vmul.f32 %v1669, %v1701
          %v1705 = vperm.slane %v1657, 0
          %v1707 = vmul.f32 %v1702, %v1705
          %v1708 = vmul.f32 %v1703, %v1705
          %v1710 = vperm.slane %v1658, 0
          %v1712 = vadd.f32 %v1707, %v1710
          %v1713 = vadd.f32 %v1708, %v1710
          %1714 = vst.msk [vmem:[#allocation3 - $0x7] sm:$0x80] %vm1659, %v1712
          %1715 = vst.msk [vmem:[#allocation3 - $0x6] sm:$0x80] %vm1659, %v1713
        $region88: #{tpu_custom_call.1} parent=79 // pred_fallthru
          _
        // Predicated region
        $region89: #{tpu_custom_call.1} parent=79 // pred_check
          %p1716 = pneg %p437
        $region90: #{tpu_custom_call.1} parent=79 // pred_check_branch
          %1718 = sbr.rel (%p1716) target = $region92
        $region91: #{tpu_custom_call.1} parent=79 // pred_region
          %s1719 = smul.u32 2, %s31
          %1721 = vsyncadd [#allocation4], 0
          %s1722 = scalar_lea.hbm %s15, %s1719
          %s1723 = sshll.u32 [#allocation3], 4
          %s1724 = int_to_ptr.vmem [resolvable:$true] %s1723
          %s1725 = sshll.u32 %s1722, 4
          %s1726 = int_to_ptr.hbm [resolvable:$true] %s1725
          %1731 = dma.vmem_to_hbm [thread:$0]  %s1724, 32, %s1726, [#allocation4], 16, 16, 1
        $region92: #{tpu_custom_call.1} parent=79 // pred_fallthru
          _
        // Predicated region
        $region93: #{tpu_custom_call.1} parent=79 // pred_check
          %p1732 = pneg %p437
        $region94: #{tpu_custom_call.1} parent=79 // pred_check_branch
          %1734 = sbr.rel (%p1732) target = $region96
        $region95: #{tpu_custom_call.1} parent=79 // pred_region
          %1736 = dma.done [#allocation4], 32
        $region96: #{tpu_custom_call.1} parent=79 // pred_fallthru
          _
      $region80: #{tpu_custom_call.1} parent=5 // pred_fallthru
        _
      %p1737 = scmp.le.s32.totalorder 2, %s22
      // Predicated region
      $region97: #{tpu_custom_call.1} parent=5 // pred_check
        %p1738 = pneg %p1737
      $region98: #{tpu_custom_call.1} parent=5 // pred_check_branch
        %1740 = sbr.rel (%p1738) target = $region100
      $region99: #{tpu_custom_call.1} parent=5 // pred_region
        %s1741 = ssub.s32 %s22, 2
      $region100: #{tpu_custom_call.1} parent=5 // pred_fallthru
        _
    $region6: #{tpu_custom_call.1} parent=1 // loop_footer
      %s26 = sadd.s32 1, %s22
    $region7: #{tpu_custom_call.1} parent=1 // loop_footer_branch
      %21 = sbr.rel target = $region3
    $region8: #{tpu_custom_call.1} parent=1 // loop_exit
      _
    %1742 = vsyncpa [#allocation4], 1
    %s1743 = scalar_lea.sflag [#allocation4], 1
    %1744 = vsyncpa %s1743, 1

</llo_original>
